<compile_context>
chip_gen: v7x
topology: tpu7x:2x2x1
jax: 0.10.0
libtpu: 0.0.40
codegen_flags: <defaults>
</compile_context>

<pallas_src>
import functools

import jax
import jax.numpy as jnp
from jax.experimental import pallas as pl
from jax.experimental.pallas import tpu as pltpu

OBS_DIM = 3                      # Pendulum-v1 observation_space.shape[0]
ACT_DIM = 1                      # Pendulum-v1 action_space.shape[0]
IN_DIM = OBS_DIM + ACT_DIM
HIDDEN = 256
LANE = 128


def _critic_kernel(xa_ref, w1_ref, b1_ref, w2_ref, b2_ref, w3_ref, b3_ref,
                   out_ref):
    # All tensors are batch-in-lanes: (features, TB).
    xa = xa_ref[...]                     # (IN_DIM, TB)  f32
    w1t = w1_ref[...]                    # (HIDDEN, IN_DIM) f32

    # ---- Layer 1 (K = 4): VPU broadcast FMAs, fuses concat + tiny matmul.
    h1 = b1_ref[...]                     # (HIDDEN, 1), broadcasts to (HIDDEN, TB)
    for k in range(IN_DIM):
        h1 = h1 + w1t[:, k:k + 1] * xa[k:k + 1, :]
    h1 = jnp.maximum(h1, 0.0)            # (HIDDEN, TB) f32

    # ---- Layer 2: (HIDDEN x HIDDEN) @ (HIDDEN, TB) on the MXU, f32 accumulate.
    h2 = jnp.dot(w2_ref[...], h1, preferred_element_type=jnp.float32) + b2_ref[...]
    h2 = jnp.maximum(h2, 0.0)            # (HIDDEN, TB) f32

    # ---- Layer 3 (N = 1): VPU multiply + sublane reduction (XLU), not the MXU.
    q = jnp.sum(h2 * w3_ref[...], axis=0, keepdims=True) + b3_ref[...]  # (1, TB)
    out_ref[...] = q.astype(out_ref.dtype)


def _round_up(n, m):
    return ((n + m - 1) // m) * m


def _pick_tiling(B, batch_tile):
    """Returns (TB, B_pad): lane-multiple batch tile and padded batch.

    Targets an even number of grid steps >= 2 (one per v7x TensorCore) while
    keeping each tile <= batch_tile columns; tiny batches use one 128-lane tile.
    """
    B_lanes = _round_up(max(B, 1), LANE)
    if B_lanes <= LANE:
        return LANE, LANE
    steps = max(2, -(-B_lanes // batch_tile))
    if steps > 2 and steps % 2:
        steps += 1                      # keep both v7x cores evenly loaded
    TB = _round_up(-(-B_lanes // steps), LANE)
    return TB, steps * TB


def prepare_params(params):
    """One-time layout transform (hoisted out of the hot path):
    transpose weights / reshape biases for the batch-in-lanes kernel."""
    w1, b1, w2, b2, w3, b3 = params
    return (jnp.asarray(w1).T,                        # (HIDDEN, IN_DIM)
            jnp.asarray(b1).reshape(HIDDEN, 1),
            jnp.asarray(w2).T,                        # (HIDDEN, HIDDEN)
            jnp.asarray(b2).reshape(HIDDEN, 1),
            jnp.asarray(w3).reshape(HIDDEN, 1),
            jnp.asarray(b3).reshape(1, 1))


@functools.partial(jax.jit, static_argnames=("batch_tile",))
def critic_forward(x, a, prep_params, *, batch_tile=2048):
    """x: (B, OBS_DIM), a: (B, ACT_DIM) -> (B, 1) float32."""
    w1t, b1c, w2t, b2c, w3c, b3 = prep_params
    B = x.shape[0]
    TB, B_pad = _pick_tiling(B, batch_tile)

    xa = jnp.concatenate([x, a], axis=-1)             # (B, IN_DIM)
    if B_pad != B:
        xa = jnp.pad(xa, ((0, B_pad - B), (0, 0)))
    xa_t = xa.T                                       # (IN_DIM, B_pad): batch -> lanes

    const = lambda arr: pl.BlockSpec(arr.shape, lambda i: (0, 0))  # VMEM-resident

    q_t = pl.pallas_call(
        _critic_kernel,
        out_shape=jax.ShapeDtypeStruct((1, B_pad), jnp.float32),
        grid=(B_pad // TB,),
        in_specs=[
            pl.BlockSpec((IN_DIM, TB), lambda i: (0, i)),   # lane-dense input tile
            const(w1t), const(b1c),
            const(w2t), const(b2c),
            const(w3c), const(b3),
        ],
        out_specs=pl.BlockSpec((1, TB), lambda i: (0, i)),  # lane-dense output row
        compiler_params=pltpu.CompilerParams(
            dimension_semantics=("parallel",)),
    )(xa_t, w1t, b1c, w2t, b2c, w3c, b3)

    return q_t[0, :B].reshape(B, 1)


def init_params(key):
    """Deterministic init matching PyTorch nn.Linear default:
    U(-1/sqrt(fan_in), 1/sqrt(fan_in)) for both weight and bias."""
    dims = [(IN_DIM, HIDDEN), (HIDDEN, HIDDEN), (HIDDEN, 1)]
    params = []
    for fan_in, fan_out in dims:
        key, kw, kb = jax.random.split(key, 3)
        bound = 1.0 / jnp.sqrt(jnp.float32(fan_in))
        w = jax.random.uniform(kw, (fan_in, fan_out), jnp.float32, -bound, bound)
        b = jax.random.uniform(kb, (1, fan_out), jnp.float32, -bound, bound)
        params += [w, b]
    return tuple(params)


def critic_reference(x, a, params):
    w1, b1, w2, b2, w3, b3 = params
    h = jnp.concatenate([x, a], axis=-1)
    h = jnp.maximum(h @ w1 + b1, 0.0)
    h = jnp.maximum(h @ w2 + b2, 0.0)
    return h @ w3 + b3


if __name__ == "__main__":
    key = jax.random.PRNGKey(0)
    kp, kx, ka = jax.random.split(key, 3)
    raw_params = init_params(kp)
    prep = prepare_params(raw_params)

    # Small single-tile batch and a multi-tile batch (exercises grid + padding).
    for B in (8, 300):
        kxb = jax.random.fold_in(kx, B)
        kab = jax.random.fold_in(ka, B)
        x = jax.random.normal(kxb, (B, OBS_DIM), jnp.float32)
        a = jax.random.uniform(kab, (B, ACT_DIM), jnp.float32, -2.0, 2.0)

        q = jax.block_until_ready(critic_forward(x, a, prep))
        q_ref = critic_reference(x, a, raw_params)

        assert q.shape == (B, 1), q.shape
        assert jnp.allclose(q, q_ref, atol=1e-2, rtol=1e-2), (
            B, float(jnp.max(jnp.abs(q - q_ref))))

    print("KERNEL_OK")
</pallas_src>

<mosaic_0001>
module attributes {stable_mosaic.version = 11 : i64} {
  func.func @_critic_kernel(%arg0: i32, %arg1: memref<4x128xf32, #tpu.memory_space<vmem>>, %arg2: memref<256x4xf32, #tpu.memory_space<vmem>>, %arg3: memref<256x1xf32, #tpu.memory_space<vmem>>, %arg4: memref<256x256xf32, #tpu.memory_space<vmem>>, %arg5: memref<256x1xf32, #tpu.memory_space<vmem>>, %arg6: memref<256x1xf32, #tpu.memory_space<vmem>>, %arg7: memref<1x1xf32, #tpu.memory_space<vmem>>, %arg8: memref<1x128xf32, #tpu.memory_space<vmem>>) attributes {dimension_semantics = [#tpu.dimension_semantics<parallel>], iteration_bounds = array<i64: 1>, scalar_prefetch = 0 : i64, scratch_operands = 0 : i64, tpu.core_type = #tpu.core_type<tc>, window_params = [{transform_indices = @transform_0, window_bounds = array<i64: 4, 128>}, {pipeline_mode = #tpu.pipeline_mode<synchronous>, transform_indices = @transform_1, window_bounds = array<i64: 256, 4>}, {pipeline_mode = #tpu.pipeline_mode<synchronous>, transform_indices = @transform_2, window_bounds = array<i64: 256, 1>}, {pipeline_mode = #tpu.pipeline_mode<synchronous>, transform_indices = @transform_3, window_bounds = array<i64: 256, 256>}, {pipeline_mode = #tpu.pipeline_mode<synchronous>, transform_indices = @transform_4, window_bounds = array<i64: 256, 1>}, {pipeline_mode = #tpu.pipeline_mode<synchronous>, transform_indices = @transform_5, window_bounds = array<i64: 256, 1>}, {pipeline_mode = #tpu.pipeline_mode<synchronous>, transform_indices = @transform_6, window_bounds = array<i64: 1, 1>}, {transform_indices = @transform_7, window_bounds = array<i64: 1, 128>}]} {
    %c0 = arith.constant 0 : index
    %c0_0 = arith.constant 0 : index
    %0 = vector.load %arg1[%c0, %c0_0] : memref<4x128xf32, #tpu.memory_space<vmem>>, vector<4x128xf32>
    %c0_1 = arith.constant 0 : index
    %c0_2 = arith.constant 0 : index
    %1 = vector.load %arg2[%c0_1, %c0_2] : memref<256x4xf32, #tpu.memory_space<vmem>>, vector<256x4xf32>
    %c0_3 = arith.constant 0 : index
    %c0_4 = arith.constant 0 : index
    %2 = vector.load %arg3[%c0_3, %c0_4] : memref<256x1xf32, #tpu.memory_space<vmem>>, vector<256x1xf32>
    %3 = vector.extract_strided_slice %1 {offsets = [0, 0], sizes = [256, 1], strides = [1, 1]} : vector<256x4xf32> to vector<256x1xf32>
    %4 = vector.extract_strided_slice %0 {offsets = [0, 0], sizes = [1, 128], strides = [1, 1]} : vector<4x128xf32> to vector<1x128xf32>
    %5 = vector.broadcast %3 : vector<256x1xf32> to vector<256x128xf32>
    %6 = vector.broadcast %4 : vector<1x128xf32> to vector<256x128xf32>
    %7 = arith.mulf %5, %6 : vector<256x128xf32>
    %8 = vector.broadcast %2 : vector<256x1xf32> to vector<256x128xf32>
    %9 = arith.addf %8, %7 : vector<256x128xf32>
    %10 = vector.extract_strided_slice %1 {offsets = [0, 1], sizes = [256, 1], strides = [1, 1]} : vector<256x4xf32> to vector<256x1xf32>
    %11 = vector.extract_strided_slice %0 {offsets = [1, 0], sizes = [1, 128], strides = [1, 1]} : vector<4x128xf32> to vector<1x128xf32>
    %12 = vector.broadcast %10 : vector<256x1xf32> to vector<256x128xf32>
    %13 = vector.broadcast %11 : vector<1x128xf32> to vector<256x128xf32>
    %14 = arith.mulf %12, %13 : vector<256x128xf32>
    %15 = arith.addf %9, %14 : vector<256x128xf32>
    %16 = vector.extract_strided_slice %1 {offsets = [0, 2], sizes = [256, 1], strides = [1, 1]} : vector<256x4xf32> to vector<256x1xf32>
    %17 = vector.extract_strided_slice %0 {offsets = [2, 0], sizes = [1, 128], strides = [1, 1]} : vector<4x128xf32> to vector<1x128xf32>
    %18 = vector.broadcast %16 : vector<256x1xf32> to vector<256x128xf32>
    %19 = vector.broadcast %17 : vector<1x128xf32> to vector<256x128xf32>
    %20 = arith.mulf %18, %19 : vector<256x128xf32>
    %21 = arith.addf %15, %20 : vector<256x128xf32>
    %22 = vector.extract_strided_slice %1 {offsets = [0, 3], sizes = [256, 1], strides = [1, 1]} : vector<256x4xf32> to vector<256x1xf32>
    %23 = vector.extract_strided_slice %0 {offsets = [3, 0], sizes = [1, 128], strides = [1, 1]} : vector<4x128xf32> to vector<1x128xf32>
    %24 = vector.broadcast %22 : vector<256x1xf32> to vector<256x128xf32>
    %25 = vector.broadcast %23 : vector<1x128xf32> to vector<256x128xf32>
    %26 = arith.mulf %24, %25 : vector<256x128xf32>
    %27 = arith.addf %21, %26 : vector<256x128xf32>
    %cst = arith.constant 0.000000e+00 : f32
    %28 = vector.broadcast %cst : f32 to vector<256x128xf32>
    %29 = arith.maximumf %27, %28 : vector<256x128xf32>
    %c0_5 = arith.constant 0 : index
    %c0_6 = arith.constant 0 : index
    %30 = vector.load %arg4[%c0_5, %c0_6] : memref<256x256xf32, #tpu.memory_space<vmem>>, vector<256x256xf32>
    %cst_7 = arith.constant dense<0.000000e+00> : vector<256x128xf32>
    %31 = tpu.matmul %30, %29, %cst_7 {dimension_numbers = #tpu.dot_dimension_numbers<[1], [0], [0], [1], [0, 0, 1, 1], [], []>} : vector<256x256xf32>, vector<256x128xf32>, vector<256x128xf32> -> vector<256x128xf32>
    %c0_8 = arith.constant 0 : index
    %c0_9 = arith.constant 0 : index
    %32 = vector.load %arg5[%c0_8, %c0_9] : memref<256x1xf32, #tpu.memory_space<vmem>>, vector<256x1xf32>
    %33 = vector.broadcast %32 : vector<256x1xf32> to vector<256x128xf32>
    %34 = arith.addf %31, %33 : vector<256x128xf32>
    %cst_10 = arith.constant 0.000000e+00 : f32
    %35 = vector.broadcast %cst_10 : f32 to vector<256x128xf32>
    %36 = arith.maximumf %34, %35 : vector<256x128xf32>
    %c0_11 = arith.constant 0 : index
    %c0_12 = arith.constant 0 : index
    %37 = vector.load %arg6[%c0_11, %c0_12] : memref<256x1xf32, #tpu.memory_space<vmem>>, vector<256x1xf32>
    %38 = vector.broadcast %37 : vector<256x1xf32> to vector<256x128xf32>
    %39 = arith.mulf %36, %38 : vector<256x128xf32>
    %cst_13 = arith.constant dense<0.000000e+00> : vector<128xf32>
    %40 = vector.multi_reduction <add>, %39, %cst_13 [0] : vector<256x128xf32> to vector<128xf32>
    %41 = vector.shape_cast %40 : vector<128xf32> to vector<1x128xf32>
    %c0_14 = arith.constant 0 : index
    %c0_15 = arith.constant 0 : index
    %42 = vector.load %arg7[%c0_14, %c0_15] : memref<1x1xf32, #tpu.memory_space<vmem>>, vector<1x1xf32>
    %43 = vector.broadcast %42 : vector<1x1xf32> to vector<1x128xf32>
    %44 = arith.addf %41, %43 : vector<1x128xf32>
    %c0_16 = arith.constant 0 : index
    %c0_17 = arith.constant 0 : index
    %45 = vector.load %arg8[%c0_16, %c0_17] : memref<1x128xf32, #tpu.memory_space<vmem>>, vector<1x128xf32>
    tpu.vector_store %arg8[%c0_16, %c0_17], %44 {strides = array<i32>} : memref<1x128xf32, #tpu.memory_space<vmem>>, vector<1x128xf32>,
    return
  }
  func.func @transform_0(%arg0: i32) -> (i32, i32) {
    %c0_i32 = arith.constant 0 : i32
    %c0_i32_0 = arith.constant 0 : i32
    return %c0_i32, %arg0 : i32, i32
  }
  func.func @transform_1(%arg0: i32) -> (i32, i32) {
    %c0_i32 = arith.constant 0 : i32
    %c0_i32_0 = arith.constant 0 : i32
    %c0_i32_1 = arith.constant 0 : i32
    return %c0_i32, %c0_i32_0 : i32, i32
  }
  func.func @transform_2(%arg0: i32) -> (i32, i32) {
    %c0_i32 = arith.constant 0 : i32
    %c0_i32_0 = arith.constant 0 : i32
    %c0_i32_1 = arith.constant 0 : i32
    return %c0_i32, %c0_i32_0 : i32, i32
  }
  func.func @transform_3(%arg0: i32) -> (i32, i32) {
    %c0_i32 = arith.constant 0 : i32
    %c0_i32_0 = arith.constant 0 : i32
    %c0_i32_1 = arith.constant 0 : i32
    return %c0_i32, %c0_i32_0 : i32, i32
  }
  func.func @transform_4(%arg0: i32) -> (i32, i32) {
    %c0_i32 = arith.constant 0 : i32
    %c0_i32_0 = arith.constant 0 : i32
    %c0_i32_1 = arith.constant 0 : i32
    return %c0_i32, %c0_i32_0 : i32, i32
  }
  func.func @transform_5(%arg0: i32) -> (i32, i32) {
    %c0_i32 = arith.constant 0 : i32
    %c0_i32_0 = arith.constant 0 : i32
    %c0_i32_1 = arith.constant 0 : i32
    return %c0_i32, %c0_i32_0 : i32, i32
  }
  func.func @transform_6(%arg0: i32) -> (i32, i32) {
    %c0_i32 = arith.constant 0 : i32
    %c0_i32_0 = arith.constant 0 : i32
    %c0_i32_1 = arith.constant 0 : i32
    return %c0_i32, %c0_i32_0 : i32, i32
  }
  func.func @transform_7(%arg0: i32) -> (i32, i32) {
    %c0_i32 = arith.constant 0 : i32
    %c0_i32_0 = arith.constant 0 : i32
    return %c0_i32, %arg0 : i32, i32
  }
}

</mosaic_0001>

<llo_original>
// kernel: critic_forward.1
$region0: #{critic_forward.1}
  #allocation0 [shape = 'u32[]', space=smem, size = 0x4, offset = 0x4, fixed_abs, tag = 'smem constant byte address 0x4 - core index']
  #allocation1 [shape = 'u32[144,128]{1,0:T(1,128)}', space=vmem, size = 0x12000, scoped, tag = 'internal scratch']
  #allocation2 [shape = 'f32[1,1]{1,0:T(1,128)S(1)}', space=vmem, size = 0x200, scoped, tag = 'scoped memory for critic_forward.1']
  %s0 = inlined_call_operand.vmem [shape: f32[4,128], index: 0, kind: input, shape index: {}]
  %s1 = inlined_call_operand.vmem [shape: f32[256,4], index: 1, kind: input, shape index: {}]
  %s2 = inlined_call_operand.vmem [shape: f32[256,1], index: 2, kind: input, shape index: {}]
  %s3 = inlined_call_operand.vmem [shape: f32[256,256], index: 3, kind: input, shape index: {}]
  %s4 = inlined_call_operand.vmem [shape: f32[256,1], index: 4, kind: input, shape index: {}]
  %s5 = inlined_call_operand.vmem [shape: f32[256,1], index: 5, kind: input, shape index: {}]
  %s6 = inlined_call_operand.<no memory space> [shape: f32[1,1], index: 6, kind: input, shape index: {}]
  %s7 = inlined_call_operand.vmem [shape: f32[1,128], index: 7, kind: output, shape index: {}]
  %s8 = sld [smem:[#allocation0]]
  $region38: #{critic_forward.1} parent=0
    _
  %s10 = ssub.s32 1, %s8
  %s11 = scalar_select 0, %s10, %s8
  %v12 = vstv %s6
  %13 = vst [vmem:[#allocation2] sm:$0x1] %v12
  // Predicated region
  $region2: #{critic_forward.1} parent=0 // pred_check
    _
  $region3: #{critic_forward.1} parent=0 // pred_check_branch
    %15 = sbr.rel (0) target = $region5
  $region4: #{critic_forward.1} parent=0 // pred_region
    _
  $region5: #{critic_forward.1} parent=0 // pred_fallthru
    _
  // Predicated region
  $region6: #{critic_forward.1} parent=0 // pred_check
    _
  $region7: #{critic_forward.1} parent=0 // pred_check_branch
    %17 = sbr.rel (0) target = $region9
  $region8: #{critic_forward.1} parent=0 // pred_region
    _
  $region9: #{critic_forward.1} parent=0 // pred_fallthru
    _
  // Predicated region
  $region10: #{critic_forward.1} parent=0 // pred_check
    _
  $region11: #{critic_forward.1} parent=0 // pred_check_branch
    %19 = sbr.rel (0) target = $region13
  $region12: #{critic_forward.1} parent=0 // pred_region
    _
  $region13: #{critic_forward.1} parent=0 // pred_fallthru
    _
  // Predicated region
  $region14: #{critic_forward.1} parent=0 // pred_check
    _
  $region15: #{critic_forward.1} parent=0 // pred_check_branch
    %21 = sbr.rel (0) target = $region17
  $region16: #{critic_forward.1} parent=0 // pred_region
    _
  $region17: #{critic_forward.1} parent=0 // pred_fallthru
    _
  // Predicated region
  $region18: #{critic_forward.1} parent=0 // pred_check
    _
  $region19: #{critic_forward.1} parent=0 // pred_check_branch
    %23 = sbr.rel (0) target = $region21
  $region20: #{critic_forward.1} parent=0 // pred_region
    _
  $region21: #{critic_forward.1} parent=0 // pred_fallthru
    _
  // Predicated region
  $region22: #{critic_forward.1} parent=0 // pred_check
    _
  $region23: #{critic_forward.1} parent=0 // pred_check_branch
    %25 = sbr.rel (0) target = $region25
  $region24: #{critic_forward.1} parent=0 // pred_region
    _
  $region25: #{critic_forward.1} parent=0 // pred_fallthru
    _
  // Predicated region
  $region26: #{critic_forward.1} parent=0 // pred_check
    _
  $region27: #{critic_forward.1} parent=0 // pred_check_branch
    %27 = sbr.rel (0) target = $region29
  $region28: #{critic_forward.1} parent=0 // pred_region
    _
  $region29: #{critic_forward.1} parent=0 // pred_fallthru
    _
  %v28 = vld [vmem:[%s0] sm:$0xf]
  %v29 = vld [vmem:[%s1] sm:$0xff]
  %v30 = vld [vmem:[%s1 + $0x8] sm:$0xff]
  %v31 = vld [vmem:[%s1 + $0x10] sm:$0xff]
  %v32 = vld [vmem:[%s1 + $0x18] sm:$0xff]
  %v33 = vld [vmem:[%s1 + $0x20] sm:$0xff]
  %v34 = vld [vmem:[%s1 + $0x28] sm:$0xff]
  %v35 = vld [vmem:[%s1 + $0x30] sm:$0xff]
  %v36 = vld [vmem:[%s1 + $0x38] sm:$0xff]
  %v37 = vld [vmem:[%s1 + $0x40] sm:$0xff]
  %v38 = vld [vmem:[%s1 + $0x48] sm:$0xff]
  %v39 = vld [vmem:[%s1 + $0x50] sm:$0xff]
  %v40 = vld [vmem:[%s1 + $0x58] sm:$0xff]
  %v41 = vld [vmem:[%s1 + $0x60] sm:$0xff]
  %v42 = vld [vmem:[%s1 + $0x68] sm:$0xff]
  %v43 = vld [vmem:[%s1 + $0x70] sm:$0xff]
  %v44 = vld [vmem:[%s1 + $0x78] sm:$0xff]
  %v45 = vld [vmem:[%s1 + $0x80] sm:$0xff]
  %v46 = vld [vmem:[%s1 + $0x88] sm:$0xff]
  %v47 = vld [vmem:[%s1 + $0x90] sm:$0xff]
  %v48 = vld [vmem:[%s1 + $0x98] sm:$0xff]
  %v49 = vld [vmem:[%s1 + $0xa0] sm:$0xff]
  %v50 = vld [vmem:[%s1 + $0xa8] sm:$0xff]
  %v51 = vld [vmem:[%s1 + $0xb0] sm:$0xff]
  %v52 = vld [vmem:[%s1 + $0xb8] sm:$0xff]
  %v53 = vld [vmem:[%s1 + $0xc0] sm:$0xff]
  %v54 = vld [vmem:[%s1 + $0xc8] sm:$0xff]
  %v55 = vld [vmem:[%s1 + $0xd0] sm:$0xff]
  %v56 = vld [vmem:[%s1 + $0xd8] sm:$0xff]
  %v57 = vld [vmem:[%s1 + $0xe0] sm:$0xff]
  %v58 = vld [vmem:[%s1 + $0xe8] sm:$0xff]
  %v59 = vld [vmem:[%s1 + $0xf0] sm:$0xff]
  %v60 = vld [vmem:[%s1 + $0xf8] sm:$0xff]
  %v61 = vld [vmem:[%s2] sm:$0xff]
  %v62 = vld [vmem:[%s2 + $0x8] sm:$0xff]
  %v63 = vld [vmem:[%s2 + $0x10] sm:$0xff]
  %v64 = vld [vmem:[%s2 + $0x18] sm:$0xff]
  %v65 = vld [vmem:[%s2 + $0x20] sm:$0xff]
  %v66 = vld [vmem:[%s2 + $0x28] sm:$0xff]
  %v67 = vld [vmem:[%s2 + $0x30] sm:$0xff]
  %v68 = vld [vmem:[%s2 + $0x38] sm:$0xff]
  %v69 = vld [vmem:[%s2 + $0x40] sm:$0xff]
  %v70 = vld [vmem:[%s2 + $0x48] sm:$0xff]
  %v71 = vld [vmem:[%s2 + $0x50] sm:$0xff]
  %v72 = vld [vmem:[%s2 + $0x58] sm:$0xff]
  %v73 = vld [vmem:[%s2 + $0x60] sm:$0xff]
  %v74 = vld [vmem:[%s2 + $0x68] sm:$0xff]
  %v75 = vld [vmem:[%s2 + $0x70] sm:$0xff]
  %v76 = vld [vmem:[%s2 + $0x78] sm:$0xff]
  %v77 = vld [vmem:[%s2 + $0x80] sm:$0xff]
  %v78 = vld [vmem:[%s2 + $0x88] sm:$0xff]
  %v79 = vld [vmem:[%s2 + $0x90] sm:$0xff]
  %v80 = vld [vmem:[%s2 + $0x98] sm:$0xff]
  %v81 = vld [vmem:[%s2 + $0xa0] sm:$0xff]
  %v82 = vld [vmem:[%s2 + $0xa8] sm:$0xff]
  %v83 = vld [vmem:[%s2 + $0xb0] sm:$0xff]
  %v84 = vld [vmem:[%s2 + $0xb8] sm:$0xff]
  %v85 = vld [vmem:[%s2 + $0xc0] sm:$0xff]
  %v86 = vld [vmem:[%s2 + $0xc8] sm:$0xff]
  %v87 = vld [vmem:[%s2 + $0xd0] sm:$0xff]
  %v88 = vld [vmem:[%s2 + $0xd8] sm:$0xff]
  %v89 = vld [vmem:[%s2 + $0xe0] sm:$0xff]
  %v90 = vld [vmem:[%s2 + $0xe8] sm:$0xff]
  %v91 = vld [vmem:[%s2 + $0xf0] sm:$0xff]
  %v92 = vld [vmem:[%s2 + $0xf8] sm:$0xff]
  %94 = vset.pattern.permute.xlu0 0
  %95 = vperm.xlu0 %94, %v29
  %v96 = vpop.permute.xlu0 %95
  %99 = vset.pattern.permute.xlu0 0
  %100 = vperm.xlu0 %99, %v30
  %v101 = vpop.permute.xlu0 %100
  %104 = vset.pattern.permute.xlu0 0
  %105 = vperm.xlu0 %104, %v31
  %v106 = vpop.permute.xlu0 %105
  %109 = vset.pattern.permute.xlu0 0
  %110 = vperm.xlu0 %109, %v32
  %v111 = vpop.permute.xlu0 %110
  %114 = vset.pattern.permute.xlu0 0
  %115 = vperm.xlu0 %114, %v33
  %v116 = vpop.permute.xlu0 %115
  %119 = vset.pattern.permute.xlu0 0
  %120 = vperm.xlu0 %119, %v34
  %v121 = vpop.permute.xlu0 %120
  %124 = vset.pattern.permute.xlu0 0
  %125 = vperm.xlu0 %124, %v35
  %v126 = vpop.permute.xlu0 %125
  %129 = vset.pattern.permute.xlu0 0
  %130 = vperm.xlu0 %129, %v36
  %v131 = vpop.permute.xlu0 %130
  %134 = vset.pattern.permute.xlu0 0
  %135 = vperm.xlu0 %134, %v37
  %v136 = vpop.permute.xlu0 %135
  %139 = vset.pattern.permute.xlu0 0
  %140 = vperm.xlu0 %139, %v38
  %v141 = vpop.permute.xlu0 %140
  %144 = vset.pattern.permute.xlu0 0
  %145 = vperm.xlu0 %144, %v39
  %v146 = vpop.permute.xlu0 %145
  %149 = vset.pattern.permute.xlu0 0
  %150 = vperm.xlu0 %149, %v40
  %v151 = vpop.permute.xlu0 %150
  %154 = vset.pattern.permute.xlu0 0
  %155 = vperm.xlu0 %154, %v41
  %v156 = vpop.permute.xlu0 %155
  %159 = vset.pattern.permute.xlu0 0
  %160 = vperm.xlu0 %159, %v42
  %v161 = vpop.permute.xlu0 %160
  %164 = vset.pattern.permute.xlu0 0
  %165 = vperm.xlu0 %164, %v43
  %v166 = vpop.permute.xlu0 %165
  %169 = vset.pattern.permute.xlu0 0
  %170 = vperm.xlu0 %169, %v44
  %v171 = vpop.permute.xlu0 %170
  %174 = vset.pattern.permute.xlu0 0
  %175 = vperm.xlu0 %174, %v45
  %v176 = vpop.permute.xlu0 %175
  %179 = vset.pattern.permute.xlu0 0
  %180 = vperm.xlu0 %179, %v46
  %v181 = vpop.permute.xlu0 %180
  %184 = vset.pattern.permute.xlu0 0
  %185 = vperm.xlu0 %184, %v47
  %v186 = vpop.permute.xlu0 %185
  %189 = vset.pattern.permute.xlu0 0
  %190 = vperm.xlu0 %189, %v48
  %v191 = vpop.permute.xlu0 %190
  %194 = vset.pattern.permute.xlu0 0
  %195 = vperm.xlu0 %194, %v49
  %v196 = vpop.permute.xlu0 %195
  %199 = vset.pattern.permute.xlu0 0
  %200 = vperm.xlu0 %199, %v50
  %v201 = vpop.permute.xlu0 %200
  %204 = vset.pattern.permute.xlu0 0
  %205 = vperm.xlu0 %204, %v51
  %v206 = vpop.permute.xlu0 %205
  %209 = vset.pattern.permute.xlu0 0
  %210 = vperm.xlu0 %209, %v52
  %v211 = vpop.permute.xlu0 %210
  %214 = vset.pattern.permute.xlu0 0
  %215 = vperm.xlu0 %214, %v53
  %v216 = vpop.permute.xlu0 %215
  %219 = vset.pattern.permute.xlu0 0
  %220 = vperm.xlu0 %219, %v54
  %v221 = vpop.permute.xlu0 %220
  %224 = vset.pattern.permute.xlu0 0
  %225 = vperm.xlu0 %224, %v55
  %v226 = vpop.permute.xlu0 %225
  %229 = vset.pattern.permute.xlu0 0
  %230 = vperm.xlu0 %229, %v56
  %v231 = vpop.permute.xlu0 %230
  %234 = vset.pattern.permute.xlu0 0
  %235 = vperm.xlu0 %234, %v57
  %v236 = vpop.permute.xlu0 %235
  %239 = vset.pattern.permute.xlu0 0
  %240 = vperm.xlu0 %239, %v58
  %v241 = vpop.permute.xlu0 %240
  %244 = vset.pattern.permute.xlu0 0
  %245 = vperm.xlu0 %244, %v59
  %v246 = vpop.permute.xlu0 %245
  %249 = vset.pattern.permute.xlu0 0
  %250 = vperm.xlu0 %249, %v60
  %v251 = vpop.permute.xlu0 %250
  %v253 = vlaneseq
  %v254 = vshrl.u32 %v253, 7
  %v255 = vsub.s32 0, %v254
  %v256 = vrot.slane %v28, %v255
  %v257 = vmul.f32 %v96, %v256
  %v258 = vmul.f32 %v101, %v256
  %v259 = vmul.f32 %v106, %v256
  %v260 = vmul.f32 %v111, %v256
  %v261 = vmul.f32 %v116, %v256
  %v262 = vmul.f32 %v121, %v256
  %v263 = vmul.f32 %v126, %v256
  %v264 = vmul.f32 %v131, %v256
  %v265 = vmul.f32 %v136, %v256
  %v266 = vmul.f32 %v141, %v256
  %v267 = vmul.f32 %v146, %v256
  %v268 = vmul.f32 %v151, %v256
  %v269 = vmul.f32 %v156, %v256
  %v270 = vmul.f32 %v161, %v256
  %v271 = vmul.f32 %v166, %v256
  %v272 = vmul.f32 %v171, %v256
  %v273 = vmul.f32 %v176, %v256
  %v274 = vmul.f32 %v181, %v256
  %v275 = vmul.f32 %v186, %v256
  %v276 = vmul.f32 %v191, %v256
  %v277 = vmul.f32 %v196, %v256
  %v278 = vmul.f32 %v201, %v256
  %v279 = vmul.f32 %v206, %v256
  %v280 = vmul.f32 %v211, %v256
  %v281 = vmul.f32 %v216, %v256
  %v282 = vmul.f32 %v221, %v256
  %v283 = vmul.f32 %v226, %v256
  %v284 = vmul.f32 %v231, %v256
  %v285 = vmul.f32 %v236, %v256
  %v286 = vmul.f32 %v241, %v256
  %v287 = vmul.f32 %v246, %v256
  %v288 = vmul.f32 %v251, %v256
  %290 = vset.pattern.permute.xlu0 0
  %291 = vperm.xlu0 %290, %v61
  %v292 = vpop.permute.xlu0 %291
  %295 = vset.pattern.permute.xlu0 0
  %296 = vperm.xlu0 %295, %v62
  %v297 = vpop.permute.xlu0 %296
  %300 = vset.pattern.permute.xlu0 0
  %301 = vperm.xlu0 %300, %v63
  %v302 = vpop.permute.xlu0 %301
  %305 = vset.pattern.permute.xlu0 0
  %306 = vperm.xlu0 %305, %v64
  %v307 = vpop.permute.xlu0 %306
  %310 = vset.pattern.permute.xlu0 0
  %311 = vperm.xlu0 %310, %v65
  %v312 = vpop.permute.xlu0 %311
  %315 = vset.pattern.permute.xlu0 0
  %316 = vperm.xlu0 %315, %v66
  %v317 = vpop.permute.xlu0 %316
  %320 = vset.pattern.permute.xlu0 0
  %321 = vperm.xlu0 %320, %v67
  %v322 = vpop.permute.xlu0 %321
  %325 = vset.pattern.permute.xlu0 0
  %326 = vperm.xlu0 %325, %v68
  %v327 = vpop.permute.xlu0 %326
  %330 = vset.pattern.permute.xlu0 0
  %331 = vperm.xlu0 %330, %v69
  %v332 = vpop.permute.xlu0 %331
  %335 = vset.pattern.permute.xlu0 0
  %336 = vperm.xlu0 %335, %v70
  %v337 = vpop.permute.xlu0 %336
  %340 = vset.pattern.permute.xlu0 0
  %341 = vperm.xlu0 %340, %v71
  %v342 = vpop.permute.xlu0 %341
  %345 = vset.pattern.permute.xlu0 0
  %346 = vperm.xlu0 %345, %v72
  %v347 = vpop.permute.xlu0 %346
  %350 = vset.pattern.permute.xlu0 0
  %351 = vperm.xlu0 %350, %v73
  %v352 = vpop.permute.xlu0 %351
  %355 = vset.pattern.permute.xlu0 0
  %356 = vperm.xlu0 %355, %v74
  %v357 = vpop.permute.xlu0 %356
  %360 = vset.pattern.permute.xlu0 0
  %361 = vperm.xlu0 %360, %v75
  %v362 = vpop.permute.xlu0 %361
  %365 = vset.pattern.permute.xlu0 0
  %366 = vperm.xlu0 %365, %v76
  %v367 = vpop.permute.xlu0 %366
  %370 = vset.pattern.permute.xlu0 0
  %371 = vperm.xlu0 %370, %v77
  %v372 = vpop.permute.xlu0 %371
  %375 = vset.pattern.permute.xlu0 0
  %376 = vperm.xlu0 %375, %v78
  %v377 = vpop.permute.xlu0 %376
  %380 = vset.pattern.permute.xlu0 0
  %381 = vperm.xlu0 %380, %v79
  %v382 = vpop.permute.xlu0 %381
  %385 = vset.pattern.permute.xlu0 0
  %386 = vperm.xlu0 %385, %v80
  %v387 = vpop.permute.xlu0 %386
  %390 = vset.pattern.permute.xlu0 0
  %391 = vperm.xlu0 %390, %v81
  %v392 = vpop.permute.xlu0 %391
  %395 = vset.pattern.permute.xlu0 0
  %396 = vperm.xlu0 %395, %v82
  %v397 = vpop.permute.xlu0 %396
  %400 = vset.pattern.permute.xlu0 0
  %401 = vperm.xlu0 %400, %v83
  %v402 = vpop.permute.xlu0 %401
  %405 = vset.pattern.permute.xlu0 0
  %406 = vperm.xlu0 %405, %v84
  %v407 = vpop.permute.xlu0 %406
  %410 = vset.pattern.permute.xlu0 0
  %411 = vperm.xlu0 %410, %v85
  %v412 = vpop.permute.xlu0 %411
  %415 = vset.pattern.permute.xlu0 0
  %416 = vperm.xlu0 %415, %v86
  %v417 = vpop.permute.xlu0 %416
  %420 = vset.pattern.permute.xlu0 0
  %421 = vperm.xlu0 %420, %v87
  %v422 = vpop.permute.xlu0 %421
  %425 = vset.pattern.permute.xlu0 0
  %426 = vperm.xlu0 %425, %v88
  %v427 = vpop.permute.xlu0 %426
  %430 = vset.pattern.permute.xlu0 0
  %431 = vperm.xlu0 %430, %v89
  %v432 = vpop.permute.xlu0 %431
  %435 = vset.pattern.permute.xlu0 0
  %436 = vperm.xlu0 %435, %v90
  %v437 = vpop.permute.xlu0 %436
  %440 = vset.pattern.permute.xlu0 0
  %441 = vperm.xlu0 %440, %v91
  %v442 = vpop.permute.xlu0 %441
  %445 = vset.pattern.permute.xlu0 0
  %446 = vperm.xlu0 %445, %v92
  %v447 = vpop.permute.xlu0 %446
  %v449 = vadd.f32 %v292, %v257
  %v450 = vadd.f32 %v297, %v258
  %v451 = vadd.f32 %v302, %v259
  %v452 = vadd.f32 %v307, %v260
  %v453 = vadd.f32 %v312, %v261
  %v454 = vadd.f32 %v317, %v262
  %v455 = vadd.f32 %v322, %v263
  %v456 = vadd.f32 %v327, %v264
  %v457 = vadd.f32 %v332, %v265
  %v458 = vadd.f32 %v337, %v266
  %v459 = vadd.f32 %v342, %v267
  %v460 = vadd.f32 %v347, %v268
  %v461 = vadd.f32 %v352, %v269
  %v462 = vadd.f32 %v357, %v270
  %v463 = vadd.f32 %v362, %v271
  %v464 = vadd.f32 %v367, %v272
  %v465 = vadd.f32 %v372, %v273
  %v466 = vadd.f32 %v377, %v274
  %v467 = vadd.f32 %v382, %v275
  %v468 = vadd.f32 %v387, %v276
  %v469 = vadd.f32 %v392, %v277
  %v470 = vadd.f32 %v397, %v278
  %v471 = vadd.f32 %v402, %v279
  %v472 = vadd.f32 %v407, %v280
  %v473 = vadd.f32 %v412, %v281
  %v474 = vadd.f32 %v417, %v282
  %v475 = vadd.f32 %v422, %v283
  %v476 = vadd.f32 %v427, %v284
  %v477 = vadd.f32 %v432, %v285
  %v478 = vadd.f32 %v437, %v286
  %v479 = vadd.f32 %v442, %v287
  %v480 = vadd.f32 %v447, %v288
  %481 = vset.pattern.permute.xlu0 1
  %482 = vperm.xlu0 %481, %v29
  %v483 = vpop.permute.xlu0 %482
  %485 = vset.pattern.permute.xlu0 1
  %486 = vperm.xlu0 %485, %v30
  %v487 = vpop.permute.xlu0 %486
  %489 = vset.pattern.permute.xlu0 1
  %490 = vperm.xlu0 %489, %v31
  %v491 = vpop.permute.xlu0 %490
  %493 = vset.pattern.permute.xlu0 1
  %494 = vperm.xlu0 %493, %v32
  %v495 = vpop.permute.xlu0 %494
  %497 = vset.pattern.permute.xlu0 1
  %498 = vperm.xlu0 %497, %v33
  %v499 = vpop.permute.xlu0 %498
  %501 = vset.pattern.permute.xlu0 1
  %502 = vperm.xlu0 %501, %v34
  %v503 = vpop.permute.xlu0 %502
  %505 = vset.pattern.permute.xlu0 1
  %506 = vperm.xlu0 %505, %v35
  %v507 = vpop.permute.xlu0 %506
  %509 = vset.pattern.permute.xlu0 1
  %510 = vperm.xlu0 %509, %v36
  %v511 = vpop.permute.xlu0 %510
  %513 = vset.pattern.permute.xlu0 1
  %514 = vperm.xlu0 %513, %v37
  %v515 = vpop.permute.xlu0 %514
  %517 = vset.pattern.permute.xlu0 1
  %518 = vperm.xlu0 %517, %v38
  %v519 = vpop.permute.xlu0 %518
  %521 = vset.pattern.permute.xlu0 1
  %522 = vperm.xlu0 %521, %v39
  %v523 = vpop.permute.xlu0 %522
  %525 = vset.pattern.permute.xlu0 1
  %526 = vperm.xlu0 %525, %v40
  %v527 = vpop.permute.xlu0 %526
  %529 = vset.pattern.permute.xlu0 1
  %530 = vperm.xlu0 %529, %v41
  %v531 = vpop.permute.xlu0 %530
  %533 = vset.pattern.permute.xlu0 1
  %534 = vperm.xlu0 %533, %v42
  %v535 = vpop.permute.xlu0 %534
  %537 = vset.pattern.permute.xlu0 1
  %538 = vperm.xlu0 %537, %v43
  %v539 = vpop.permute.xlu0 %538
  %541 = vset.pattern.permute.xlu0 1
  %542 = vperm.xlu0 %541, %v44
  %v543 = vpop.permute.xlu0 %542
  %545 = vset.pattern.permute.xlu0 1
  %546 = vperm.xlu0 %545, %v45
  %v547 = vpop.permute.xlu0 %546
  %549 = vset.pattern.permute.xlu0 1
  %550 = vperm.xlu0 %549, %v46
  %v551 = vpop.permute.xlu0 %550
  %553 = vset.pattern.permute.xlu0 1
  %554 = vperm.xlu0 %553, %v47
  %v555 = vpop.permute.xlu0 %554
  %557 = vset.pattern.permute.xlu0 1
  %558 = vperm.xlu0 %557, %v48
  %v559 = vpop.permute.xlu0 %558
  %561 = vset.pattern.permute.xlu0 1
  %562 = vperm.xlu0 %561, %v49
  %v563 = vpop.permute.xlu0 %562
  %565 = vset.pattern.permute.xlu0 1
  %566 = vperm.xlu0 %565, %v50
  %v567 = vpop.permute.xlu0 %566
  %569 = vset.pattern.permute.xlu0 1
  %570 = vperm.xlu0 %569, %v51
  %v571 = vpop.permute.xlu0 %570
  %573 = vset.pattern.permute.xlu0 1
  %574 = vperm.xlu0 %573, %v52
  %v575 = vpop.permute.xlu0 %574
  %577 = vset.pattern.permute.xlu0 1
  %578 = vperm.xlu0 %577, %v53
  %v579 = vpop.permute.xlu0 %578
  %581 = vset.pattern.permute.xlu0 1
  %582 = vperm.xlu0 %581, %v54
  %v583 = vpop.permute.xlu0 %582
  %585 = vset.pattern.permute.xlu0 1
  %586 = vperm.xlu0 %585, %v55
  %v587 = vpop.permute.xlu0 %586
  %589 = vset.pattern.permute.xlu0 1
  %590 = vperm.xlu0 %589, %v56
  %v591 = vpop.permute.xlu0 %590
  %593 = vset.pattern.permute.xlu0 1
  %594 = vperm.xlu0 %593, %v57
  %v595 = vpop.permute.xlu0 %594
  %597 = vset.pattern.permute.xlu0 1
  %598 = vperm.xlu0 %597, %v58
  %v599 = vpop.permute.xlu0 %598
  %601 = vset.pattern.permute.xlu0 1
  %602 = vperm.xlu0 %601, %v59
  %v603 = vpop.permute.xlu0 %602
  %605 = vset.pattern.permute.xlu0 1
  %606 = vperm.xlu0 %605, %v60
  %v607 = vpop.permute.xlu0 %606
  %v609 = vlaneseq
  %v610 = vshrl.u32 %v609, 7
  %v611 = vsub.s32 1, %v610
  %v612 = vrot.slane %v28, %v611
  %v613 = vmul.f32 %v483, %v612
  %v614 = vmul.f32 %v487, %v612
  %v615 = vmul.f32 %v491, %v612
  %v616 = vmul.f32 %v495, %v612
  %v617 = vmul.f32 %v499, %v612
  %v618 = vmul.f32 %v503, %v612
  %v619 = vmul.f32 %v507, %v612
  %v620 = vmul.f32 %v511, %v612
  %v621 = vmul.f32 %v515, %v612
  %v622 = vmul.f32 %v519, %v612
  %v623 = vmul.f32 %v523, %v612
  %v624 = vmul.f32 %v527, %v612
  %v625 = vmul.f32 %v531, %v612
  %v626 = vmul.f32 %v535, %v612
  %v627 = vmul.f32 %v539, %v612
  %v628 = vmul.f32 %v543, %v612
  %v629 = vmul.f32 %v547, %v612
  %v630 = vmul.f32 %v551, %v612
  %v631 = vmul.f32 %v555, %v612
  %v632 = vmul.f32 %v559, %v612
  %v633 = vmul.f32 %v563, %v612
  %v634 = vmul.f32 %v567, %v612
  %v635 = vmul.f32 %v571, %v612
  %v636 = vmul.f32 %v575, %v612
  %v637 = vmul.f32 %v579, %v612
  %v638 = vmul.f32 %v583, %v612
  %v639 = vmul.f32 %v587, %v612
  %v640 = vmul.f32 %v591, %v612
  %v641 = vmul.f32 %v595, %v612
  %v642 = vmul.f32 %v599, %v612
  %v643 = vmul.f32 %v603, %v612
  %v644 = vmul.f32 %v607, %v612
  %v645 = vadd.f32 %v449, %v613
  %v646 = vadd.f32 %v450, %v614
  %v647 = vadd.f32 %v451, %v615
  %v648 = vadd.f32 %v452, %v616
  %v649 = vadd.f32 %v453, %v617
  %v650 = vadd.f32 %v454, %v618
  %v651 = vadd.f32 %v455, %v619
  %v652 = vadd.f32 %v456, %v620
  %v653 = vadd.f32 %v457, %v621
  %v654 = vadd.f32 %v458, %v622
  %v655 = vadd.f32 %v459, %v623
  %v656 = vadd.f32 %v460, %v624
  %v657 = vadd.f32 %v461, %v625
  %v658 = vadd.f32 %v462, %v626
  %v659 = vadd.f32 %v463, %v627
  %v660 = vadd.f32 %v464, %v628
  %v661 = vadd.f32 %v465, %v629
  %v662 = vadd.f32 %v466, %v630
  %v663 = vadd.f32 %v467, %v631
  %v664 = vadd.f32 %v468, %v632
  %v665 = vadd.f32 %v469, %v633
  %v666 = vadd.f32 %v470, %v634
  %v667 = vadd.f32 %v471, %v635
  %v668 = vadd.f32 %v472, %v636
  %v669 = vadd.f32 %v473, %v637
  %v670 = vadd.f32 %v474, %v638
  %v671 = vadd.f32 %v475, %v639
  %v672 = vadd.f32 %v476, %v640
  %v673 = vadd.f32 %v477, %v641
  %v674 = vadd.f32 %v478, %v642
  %v675 = vadd.f32 %v479, %v643
  %v676 = vadd.f32 %v480, %v644
  %677 = vset.pattern.permute.xlu0 2
  %678 = vperm.xlu0 %677, %v29
  %v679 = vpop.permute.xlu0 %678
  %681 = vset.pattern.permute.xlu0 2
  %682 = vperm.xlu0 %681, %v30
  %v683 = vpop.permute.xlu0 %682
  %685 = vset.pattern.permute.xlu0 2
  %686 = vperm.xlu0 %685, %v31
  %v687 = vpop.permute.xlu0 %686
  %689 = vset.pattern.permute.xlu0 2
  %690 = vperm.xlu0 %689, %v32
  %v691 = vpop.permute.xlu0 %690
  %693 = vset.pattern.permute.xlu0 2
  %694 = vperm.xlu0 %693, %v33
  %v695 = vpop.permute.xlu0 %694
  %697 = vset.pattern.permute.xlu0 2
  %698 = vperm.xlu0 %697, %v34
  %v699 = vpop.permute.xlu0 %698
  %701 = vset.pattern.permute.xlu0 2
  %702 = vperm.xlu0 %701, %v35
  %v703 = vpop.permute.xlu0 %702
  %705 = vset.pattern.permute.xlu0 2
  %706 = vperm.xlu0 %705, %v36
  %v707 = vpop.permute.xlu0 %706
  %709 = vset.pattern.permute.xlu0 2
  %710 = vperm.xlu0 %709, %v37
  %v711 = vpop.permute.xlu0 %710
  %713 = vset.pattern.permute.xlu0 2
  %714 = vperm.xlu0 %713, %v38
  %v715 = vpop.permute.xlu0 %714
  %717 = vset.pattern.permute.xlu0 2
  %718 = vperm.xlu0 %717, %v39
  %v719 = vpop.permute.xlu0 %718
  %721 = vset.pattern.permute.xlu0 2
  %722 = vperm.xlu0 %721, %v40
  %v723 = vpop.permute.xlu0 %722
  %725 = vset.pattern.permute.xlu0 2
  %726 = vperm.xlu0 %725, %v41
  %v727 = vpop.permute.xlu0 %726
  %729 = vset.pattern.permute.xlu0 2
  %730 = vperm.xlu0 %729, %v42
  %v731 = vpop.permute.xlu0 %730
  %733 = vset.pattern.permute.xlu0 2
  %734 = vperm.xlu0 %733, %v43
  %v735 = vpop.permute.xlu0 %734
  %737 = vset.pattern.permute.xlu0 2
  %738 = vperm.xlu0 %737, %v44
  %v739 = vpop.permute.xlu0 %738
  %741 = vset.pattern.permute.xlu0 2
  %742 = vperm.xlu0 %741, %v45
  %v743 = vpop.permute.xlu0 %742
  %745 = vset.pattern.permute.xlu0 2
  %746 = vperm.xlu0 %745, %v46
  %v747 = vpop.permute.xlu0 %746
  %749 = vset.pattern.permute.xlu0 2
  %750 = vperm.xlu0 %749, %v47
  %v751 = vpop.permute.xlu0 %750
  %753 = vset.pattern.permute.xlu0 2
  %754 = vperm.xlu0 %753, %v48
  %v755 = vpop.permute.xlu0 %754
  %757 = vset.pattern.permute.xlu0 2
  %758 = vperm.xlu0 %757, %v49
  %v759 = vpop.permute.xlu0 %758
  %761 = vset.pattern.permute.xlu0 2
  %762 = vperm.xlu0 %761, %v50
  %v763 = vpop.permute.xlu0 %762
  %765 = vset.pattern.permute.xlu0 2
  %766 = vperm.xlu0 %765, %v51
  %v767 = vpop.permute.xlu0 %766
  %769 = vset.pattern.permute.xlu0 2
  %770 = vperm.xlu0 %769, %v52
  %v771 = vpop.permute.xlu0 %770
  %773 = vset.pattern.permute.xlu0 2
  %774 = vperm.xlu0 %773, %v53
  %v775 = vpop.permute.xlu0 %774
  %777 = vset.pattern.permute.xlu0 2
  %778 = vperm.xlu0 %777, %v54
  %v779 = vpop.permute.xlu0 %778
  %781 = vset.pattern.permute.xlu0 2
  %782 = vperm.xlu0 %781, %v55
  %v783 = vpop.permute.xlu0 %782
  %785 = vset.pattern.permute.xlu0 2
  %786 = vperm.xlu0 %785, %v56
  %v787 = vpop.permute.xlu0 %786
  %789 = vset.pattern.permute.xlu0 2
  %790 = vperm.xlu0 %789, %v57
  %v791 = vpop.permute.xlu0 %790
  %793 = vset.pattern.permute.xlu0 2
  %794 = vperm.xlu0 %793, %v58
  %v795 = vpop.permute.xlu0 %794
  %797 = vset.pattern.permute.xlu0 2
  %798 = vperm.xlu0 %797, %v59
  %v799 = vpop.permute.xlu0 %798
  %801 = vset.pattern.permute.xlu0 2
  %802 = vperm.xlu0 %801, %v60
  %v803 = vpop.permute.xlu0 %802
  %v805 = vlaneseq
  %v806 = vshrl.u32 %v805, 7
  %v807 = vsub.s32 2, %v806
  %v808 = vrot.slane %v28, %v807
  %v809 = vmul.f32 %v679, %v808
  %v810 = vmul.f32 %v683, %v808
  %v811 = vmul.f32 %v687, %v808
  %v812 = vmul.f32 %v691, %v808
  %v813 = vmul.f32 %v695, %v808
  %v814 = vmul.f32 %v699, %v808
  %v815 = vmul.f32 %v703, %v808
  %v816 = vmul.f32 %v707, %v808
  %v817 = vmul.f32 %v711, %v808
  %v818 = vmul.f32 %v715, %v808
  %v819 = vmul.f32 %v719, %v808
  %v820 = vmul.f32 %v723, %v808
  %v821 = vmul.f32 %v727, %v808
  %v822 = vmul.f32 %v731, %v808
  %v823 = vmul.f32 %v735, %v808
  %v824 = vmul.f32 %v739, %v808
  %v825 = vmul.f32 %v743, %v808
  %v826 = vmul.f32 %v747, %v808
  %v827 = vmul.f32 %v751, %v808
  %v828 = vmul.f32 %v755, %v808
  %v829 = vmul.f32 %v759, %v808
  %v830 = vmul.f32 %v763, %v808
  %v831 = vmul.f32 %v767, %v808
  %v832 = vmul.f32 %v771, %v808
  %v833 = vmul.f32 %v775, %v808
  %v834 = vmul.f32 %v779, %v808
  %v835 = vmul.f32 %v783, %v808
  %v836 = vmul.f32 %v787, %v808
  %v837 = vmul.f32 %v791, %v808
  %v838 = vmul.f32 %v795, %v808
  %v839 = vmul.f32 %v799, %v808
  %v840 = vmul.f32 %v803, %v808
  %v841 = vadd.f32 %v645, %v809
  %v842 = vadd.f32 %v646, %v810
  %v843 = vadd.f32 %v647, %v811
  %v844 = vadd.f32 %v648, %v812
  %v845 = vadd.f32 %v649, %v813
  %v846 = vadd.f32 %v650, %v814
  %v847 = vadd.f32 %v651, %v815
  %v848 = vadd.f32 %v652, %v816
  %v849 = vadd.f32 %v653, %v817
  %v850 = vadd.f32 %v654, %v818
  %v851 = vadd.f32 %v655, %v819
  %v852 = vadd.f32 %v656, %v820
  %v853 = vadd.f32 %v657, %v821
  %v854 = vadd.f32 %v658, %v822
  %v855 = vadd.f32 %v659, %v823
  %v856 = vadd.f32 %v660, %v824
  %v857 = vadd.f32 %v661, %v825
  %v858 = vadd.f32 %v662, %v826
  %v859 = vadd.f32 %v663, %v827
  %v860 = vadd.f32 %v664, %v828
  %v861 = vadd.f32 %v665, %v829
  %v862 = vadd.f32 %v666, %v830
  %v863 = vadd.f32 %v667, %v831
  %v864 = vadd.f32 %v668, %v832
  %v865 = vadd.f32 %v669, %v833
  %v866 = vadd.f32 %v670, %v834
  %v867 = vadd.f32 %v671, %v835
  %v868 = vadd.f32 %v672, %v836
  %v869 = vadd.f32 %v673, %v837
  %v870 = vadd.f32 %v674, %v838
  %v871 = vadd.f32 %v675, %v839
  %v872 = vadd.f32 %v676, %v840
  %873 = vset.pattern.permute.xlu0 3
  %874 = vperm.xlu0 %873, %v29
  %v875 = vpop.permute.xlu0 %874
  %877 = vset.pattern.permute.xlu0 3
  %878 = vperm.xlu0 %877, %v30
  %v879 = vpop.permute.xlu0 %878
  %881 = vset.pattern.permute.xlu0 3
  %882 = vperm.xlu0 %881, %v31
  %v883 = vpop.permute.xlu0 %882
  %885 = vset.pattern.permute.xlu0 3
  %886 = vperm.xlu0 %885, %v32
  %v887 = vpop.permute.xlu0 %886
  %889 = vset.pattern.permute.xlu0 3
  %890 = vperm.xlu0 %889, %v33
  %v891 = vpop.permute.xlu0 %890
  %893 = vset.pattern.permute.xlu0 3
  %894 = vperm.xlu0 %893, %v34
  %v895 = vpop.permute.xlu0 %894
  %897 = vset.pattern.permute.xlu0 3
  %898 = vperm.xlu0 %897, %v35
  %v899 = vpop.permute.xlu0 %898
  %901 = vset.pattern.permute.xlu0 3
  %902 = vperm.xlu0 %901, %v36
  %v903 = vpop.permute.xlu0 %902
  %905 = vset.pattern.permute.xlu0 3
  %906 = vperm.xlu0 %905, %v37
  %v907 = vpop.permute.xlu0 %906
  %909 = vset.pattern.permute.xlu0 3
  %910 = vperm.xlu0 %909, %v38
  %v911 = vpop.permute.xlu0 %910
  %913 = vset.pattern.permute.xlu0 3
  %914 = vperm.xlu0 %913, %v39
  %v915 = vpop.permute.xlu0 %914
  %917 = vset.pattern.permute.xlu0 3
  %918 = vperm.xlu0 %917, %v40
  %v919 = vpop.permute.xlu0 %918
  %921 = vset.pattern.permute.xlu0 3
  %922 = vperm.xlu0 %921, %v41
  %v923 = vpop.permute.xlu0 %922
  %925 = vset.pattern.permute.xlu0 3
  %926 = vperm.xlu0 %925, %v42
  %v927 = vpop.permute.xlu0 %926
  %929 = vset.pattern.permute.xlu0 3
  %930 = vperm.xlu0 %929, %v43
  %v931 = vpop.permute.xlu0 %930
  %933 = vset.pattern.permute.xlu0 3
  %934 = vperm.xlu0 %933, %v44
  %v935 = vpop.permute.xlu0 %934
  %937 = vset.pattern.permute.xlu0 3
  %938 = vperm.xlu0 %937, %v45
  %v939 = vpop.permute.xlu0 %938
  %941 = vset.pattern.permute.xlu0 3
  %942 = vperm.xlu0 %941, %v46
  %v943 = vpop.permute.xlu0 %942
  %945 = vset.pattern.permute.xlu0 3
  %946 = vperm.xlu0 %945, %v47
  %v947 = vpop.permute.xlu0 %946
  %949 = vset.pattern.permute.xlu0 3
  %950 = vperm.xlu0 %949, %v48
  %v951 = vpop.permute.xlu0 %950
  %953 = vset.pattern.permute.xlu0 3
  %954 = vperm.xlu0 %953, %v49
  %v955 = vpop.permute.xlu0 %954
  %957 = vset.pattern.permute.xlu0 3
  %958 = vperm.xlu0 %957, %v50
  %v959 = vpop.permute.xlu0 %958
  %961 = vset.pattern.permute.xlu0 3
  %962 = vperm.xlu0 %961, %v51
  %v963 = vpop.permute.xlu0 %962
  %965 = vset.pattern.permute.xlu0 3
  %966 = vperm.xlu0 %965, %v52
  %v967 = vpop.permute.xlu0 %966
  %969 = vset.pattern.permute.xlu0 3
  %970 = vperm.xlu0 %969, %v53
  %v971 = vpop.permute.xlu0 %970
  %973 = vset.pattern.permute.xlu0 3
  %974 = vperm.xlu0 %973, %v54
  %v975 = vpop.permute.xlu0 %974
  %977 = vset.pattern.permute.xlu0 3
  %978 = vperm.xlu0 %977, %v55
  %v979 = vpop.permute.xlu0 %978
  %981 = vset.pattern.permute.xlu0 3
  %982 = vperm.xlu0 %981, %v56
  %v983 = vpop.permute.xlu0 %982
  %985 = vset.pattern.permute.xlu0 3
  %986 = vperm.xlu0 %985, %v57
  %v987 = vpop.permute.xlu0 %986
  %989 = vset.pattern.permute.xlu0 3
  %990 = vperm.xlu0 %989, %v58
  %v991 = vpop.permute.xlu0 %990
  %993 = vset.pattern.permute.xlu0 3
  %994 = vperm.xlu0 %993, %v59
  %v995 = vpop.permute.xlu0 %994
  %997 = vset.pattern.permute.xlu0 3
  %998 = vperm.xlu0 %997, %v60
  %v999 = vpop.permute.xlu0 %998
  %v1001 = vlaneseq
  %v1002 = vshrl.u32 %v1001, 7
  %v1003 = vsub.s32 3, %v1002
  %v1004 = vrot.slane %v28, %v1003
  %v1005 = vmul.f32 %v875, %v1004
  %v1006 = vmul.f32 %v879, %v1004
  %v1007 = vmul.f32 %v883, %v1004
  %v1008 = vmul.f32 %v887, %v1004
  %v1009 = vmul.f32 %v891, %v1004
  %v1010 = vmul.f32 %v895, %v1004
  %v1011 = vmul.f32 %v899, %v1004
  %v1012 = vmul.f32 %v903, %v1004
  %v1013 = vmul.f32 %v907, %v1004
  %v1014 = vmul.f32 %v911, %v1004
  %v1015 = vmul.f32 %v915, %v1004
  %v1016 = vmul.f32 %v919, %v1004
  %v1017 = vmul.f32 %v923, %v1004
  %v1018 = vmul.f32 %v927, %v1004
  %v1019 = vmul.f32 %v931, %v1004
  %v1020 = vmul.f32 %v935, %v1004
  %v1021 = vmul.f32 %v939, %v1004
  %v1022 = vmul.f32 %v943, %v1004
  %v1023 = vmul.f32 %v947, %v1004
  %v1024 = vmul.f32 %v951, %v1004
  %v1025 = vmul.f32 %v955, %v1004
  %v1026 = vmul.f32 %v959, %v1004
  %v1027 = vmul.f32 %v963, %v1004
  %v1028 = vmul.f32 %v967, %v1004
  %v1029 = vmul.f32 %v971, %v1004
  %v1030 = vmul.f32 %v975, %v1004
  %v1031 = vmul.f32 %v979, %v1004
  %v1032 = vmul.f32 %v983, %v1004
  %v1033 = vmul.f32 %v987, %v1004
  %v1034 = vmul.f32 %v991, %v1004
  %v1035 = vmul.f32 %v995, %v1004
  %v1036 = vmul.f32 %v999, %v1004
  %v1037 = vadd.f32 %v841, %v1005
  %v1038 = vadd.f32 %v842, %v1006
  %v1039 = vadd.f32 %v843, %v1007
  %v1040 = vadd.f32 %v844, %v1008
  %v1041 = vadd.f32 %v845, %v1009
  %v1042 = vadd.f32 %v846, %v1010
  %v1043 = vadd.f32 %v847, %v1011
  %v1044 = vadd.f32 %v848, %v1012
  %v1045 = vadd.f32 %v849, %v1013
  %v1046 = vadd.f32 %v850, %v1014
  %v1047 = vadd.f32 %v851, %v1015
  %v1048 = vadd.f32 %v852, %v1016
  %v1049 = vadd.f32 %v853, %v1017
  %v1050 = vadd.f32 %v854, %v1018
  %v1051 = vadd.f32 %v855, %v1019
  %v1052 = vadd.f32 %v856, %v1020
  %v1053 = vadd.f32 %v857, %v1021
  %v1054 = vadd.f32 %v858, %v1022
  %v1055 = vadd.f32 %v859, %v1023
  %v1056 = vadd.f32 %v860, %v1024
  %v1057 = vadd.f32 %v861, %v1025
  %v1058 = vadd.f32 %v862, %v1026
  %v1059 = vadd.f32 %v863, %v1027
  %v1060 = vadd.f32 %v864, %v1028
  %v1061 = vadd.f32 %v865, %v1029
  %v1062 = vadd.f32 %v866, %v1030
  %v1063 = vadd.f32 %v867, %v1031
  %v1064 = vadd.f32 %v868, %v1032
  %v1065 = vadd.f32 %v869, %v1033
  %v1066 = vadd.f32 %v870, %v1034
  %v1067 = vadd.f32 %v871, %v1035
  %v1068 = vadd.f32 %v872, %v1036
  %v1069 = vmax.f32 %v1037, 0.0
  %v1070 = vmax.f32 %v1038, 0.0
  %v1071 = vmax.f32 %v1039, 0.0
  %v1072 = vmax.f32 %v1040, 0.0
  %v1073 = vmax.f32 %v1041, 0.0
  %v1074 = vmax.f32 %v1042, 0.0
  %v1075 = vmax.f32 %v1043, 0.0
  %v1076 = vmax.f32 %v1044, 0.0
  %v1077 = vmax.f32 %v1045, 0.0
  %v1078 = vmax.f32 %v1046, 0.0
  %v1079 = vmax.f32 %v1047, 0.0
  %v1080 = vmax.f32 %v1048, 0.0
  %v1081 = vmax.f32 %v1049, 0.0
  %v1082 = vmax.f32 %v1050, 0.0
  %v1083 = vmax.f32 %v1051, 0.0
  %v1084 = vmax.f32 %v1052, 0.0
  %v1085 = vmax.f32 %v1053, 0.0
  %v1086 = vmax.f32 %v1054, 0.0
  %v1087 = vmax.f32 %v1055, 0.0
  %v1088 = vmax.f32 %v1056, 0.0
  %v1089 = vmax.f32 %v1057, 0.0
  %v1090 = vmax.f32 %v1058, 0.0
  %v1091 = vmax.f32 %v1059, 0.0
  %v1092 = vmax.f32 %v1060, 0.0
  %v1093 = vmax.f32 %v1061, 0.0
  %v1094 = vmax.f32 %v1062, 0.0
  %v1095 = vmax.f32 %v1063, 0.0
  %v1096 = vmax.f32 %v1064, 0.0
  %v1097 = vmax.f32 %v1065, 0.0
  %v1098 = vmax.f32 %v1066, 0.0
  %v1099 = vmax.f32 %v1067, 0.0
  %v1100 = vmax.f32 %v1068, 0.0
  %v1101 = vld [vmem:[%s3] sm:$0xff]
  %v1102 = vld [vmem:[%s3 + $0x8] sm:$0xff]
  %v1103 = vld [vmem:[%s3 + $0x10] sm:$0xff]
  %v1104 = vld [vmem:[%s3 + $0x18] sm:$0xff]
  %v1105 = vld [vmem:[%s3 + $0x20] sm:$0xff]
  %v1106 = vld [vmem:[%s3 + $0x28] sm:$0xff]
  %v1107 = vld [vmem:[%s3 + $0x30] sm:$0xff]
  %v1108 = vld [vmem:[%s3 + $0x38] sm:$0xff]
  %v1109 = vld [vmem:[%s3 + $0x40] sm:$0xff]
  %v1110 = vld [vmem:[%s3 + $0x48] sm:$0xff]
  %v1111 = vld [vmem:[%s3 + $0x50] sm:$0xff]
  %v1112 = vld [vmem:[%s3 + $0x58] sm:$0xff]
  %v1113 = vld [vmem:[%s3 + $0x60] sm:$0xff]
  %v1114 = vld [vmem:[%s3 + $0x68] sm:$0xff]
  %v1115 = vld [vmem:[%s3 + $0x70] sm:$0xff]
  %v1116 = vld [vmem:[%s3 + $0x78] sm:$0xff]
  %v1117 = vld [vmem:[%s3 + $0x80] sm:$0xff]
  %v1118 = vld [vmem:[%s3 + $0x88] sm:$0xff]
  %v1119 = vld [vmem:[%s3 + $0x90] sm:$0xff]
  %v1120 = vld [vmem:[%s3 + $0x98] sm:$0xff]
  %v1121 = vld [vmem:[%s3 + $0xa0] sm:$0xff]
  %v1122 = vld [vmem:[%s3 + $0xa8] sm:$0xff]
  %v1123 = vld [vmem:[%s3 + $0xb0] sm:$0xff]
  %v1124 = vld [vmem:[%s3 + $0xb8] sm:$0xff]
  %v1125 = vld [vmem:[%s3 + $0xc0] sm:$0xff]
  %v1126 = vld [vmem:[%s3 + $0xc8] sm:$0xff]
  %v1127 = vld [vmem:[%s3 + $0xd0] sm:$0xff]
  %v1128 = vld [vmem:[%s3 + $0xd8] sm:$0xff]
  %v1129 = vld [vmem:[%s3 + $0xe0] sm:$0xff]
  %v1130 = vld [vmem:[%s3 + $0xe8] sm:$0xff]
  %v1131 = vld [vmem:[%s3 + $0xf0] sm:$0xff]
  %v1132 = vld [vmem:[%s3 + $0xf8] sm:$0xff]
  %v1133 = vld [vmem:[%s3 + $0x100] sm:$0xff]
  %v1134 = vld [vmem:[%s3 + $0x108] sm:$0xff]
  %v1135 = vld [vmem:[%s3 + $0x110] sm:$0xff]
  %v1136 = vld [vmem:[%s3 + $0x118] sm:$0xff]
  %v1137 = vld [vmem:[%s3 + $0x120] sm:$0xff]
  %v1138 = vld [vmem:[%s3 + $0x128] sm:$0xff]
  %v1139 = vld [vmem:[%s3 + $0x130] sm:$0xff]
  %v1140 = vld [vmem:[%s3 + $0x138] sm:$0xff]
  %v1141 = vld [vmem:[%s3 + $0x140] sm:$0xff]
  %v1142 = vld [vmem:[%s3 + $0x148] sm:$0xff]
  %v1143 = vld [vmem:[%s3 + $0x150] sm:$0xff]
  %v1144 = vld [vmem:[%s3 + $0x158] sm:$0xff]
  %v1145 = vld [vmem:[%s3 + $0x160] sm:$0xff]
  %v1146 = vld [vmem:[%s3 + $0x168] sm:$0xff]
  %v1147 = vld [vmem:[%s3 + $0x170] sm:$0xff]
  %v1148 = vld [vmem:[%s3 + $0x178] sm:$0xff]
  %v1149 = vld [vmem:[%s3 + $0x180] sm:$0xff]
  %v1150 = vld [vmem:[%s3 + $0x188] sm:$0xff]
  %v1151 = vld [vmem:[%s3 + $0x190] sm:$0xff]
  %v1152 = vld [vmem:[%s3 + $0x198] sm:$0xff]
  %v1153 = vld [vmem:[%s3 + $0x1a0] sm:$0xff]
  %v1154 = vld [vmem:[%s3 + $0x1a8] sm:$0xff]
  %v1155 = vld [vmem:[%s3 + $0x1b0] sm:$0xff]
  %v1156 = vld [vmem:[%s3 + $0x1b8] sm:$0xff]
  %v1157 = vld [vmem:[%s3 + $0x1c0] sm:$0xff]
  %v1158 = vld [vmem:[%s3 + $0x1c8] sm:$0xff]
  %v1159 = vld [vmem:[%s3 + $0x1d0] sm:$0xff]
  %v1160 = vld [vmem:[%s3 + $0x1d8] sm:$0xff]
  %v1161 = vld [vmem:[%s3 + $0x1e0] sm:$0xff]
  %v1162 = vld [vmem:[%s3 + $0x1e8] sm:$0xff]
  %v1163 = vld [vmem:[%s3 + $0x1f0] sm:$0xff]
  %v1164 = vld [vmem:[%s3 + $0x1f8] sm:$0xff]
  %v1165 = vld [vmem:[%s4] sm:$0xff]
  %v1166 = vld [vmem:[%s4 + $0x8] sm:$0xff]
  %v1167 = vld [vmem:[%s4 + $0x10] sm:$0xff]
  %v1168 = vld [vmem:[%s4 + $0x18] sm:$0xff]
  %v1169 = vld [vmem:[%s4 + $0x20] sm:$0xff]
  %v1170 = vld [vmem:[%s4 + $0x28] sm:$0xff]
  %v1171 = vld [vmem:[%s4 + $0x30] sm:$0xff]
  %v1172 = vld [vmem:[%s4 + $0x38] sm:$0xff]
  %v1173 = vld [vmem:[%s4 + $0x40] sm:$0xff]
  %v1174 = vld [vmem:[%s4 + $0x48] sm:$0xff]
  %v1175 = vld [vmem:[%s4 + $0x50] sm:$0xff]
  %v1176 = vld [vmem:[%s4 + $0x58] sm:$0xff]
  %v1177 = vld [vmem:[%s4 + $0x60] sm:$0xff]
  %v1178 = vld [vmem:[%s4 + $0x68] sm:$0xff]
  %v1179 = vld [vmem:[%s4 + $0x70] sm:$0xff]
  %v1180 = vld [vmem:[%s4 + $0x78] sm:$0xff]
  %v1181 = vld [vmem:[%s4 + $0x80] sm:$0xff]
  %v1182 = vld [vmem:[%s4 + $0x88] sm:$0xff]
  %v1183 = vld [vmem:[%s4 + $0x90] sm:$0xff]
  %v1184 = vld [vmem:[%s4 + $0x98] sm:$0xff]
  %v1185 = vld [vmem:[%s4 + $0xa0] sm:$0xff]
  %v1186 = vld [vmem:[%s4 + $0xa8] sm:$0xff]
  %v1187 = vld [vmem:[%s4 + $0xb0] sm:$0xff]
  %v1188 = vld [vmem:[%s4 + $0xb8] sm:$0xff]
  %v1189 = vld [vmem:[%s4 + $0xc0] sm:$0xff]
  %v1190 = vld [vmem:[%s4 + $0xc8] sm:$0xff]
  %v1191 = vld [vmem:[%s4 + $0xd0] sm:$0xff]
  %v1192 = vld [vmem:[%s4 + $0xd8] sm:$0xff]
  %v1193 = vld [vmem:[%s4 + $0xe0] sm:$0xff]
  %v1194 = vld [vmem:[%s4 + $0xe8] sm:$0xff]
  %v1195 = vld [vmem:[%s4 + $0xf0] sm:$0xff]
  %v1196 = vld [vmem:[%s4 + $0xf8] sm:$0xff]
  %1198 = vset.pattern.permute.xlu0 0
  %1199 = vperm.xlu0 %1198, %v1165
  %v1200 = vpop.permute.xlu0 %1199
  %1203 = vset.pattern.permute.xlu0 0
  %1204 = vperm.xlu0 %1203, %v1166
  %v1205 = vpop.permute.xlu0 %1204
  %1208 = vset.pattern.permute.xlu0 0
  %1209 = vperm.xlu0 %1208, %v1167
  %v1210 = vpop.permute.xlu0 %1209
  %1213 = vset.pattern.permute.xlu0 0
  %1214 = vperm.xlu0 %1213, %v1168
  %v1215 = vpop.permute.xlu0 %1214
  %1218 = vset.pattern.permute.xlu0 0
  %1219 = vperm.xlu0 %1218, %v1169
  %v1220 = vpop.permute.xlu0 %1219
  %1223 = vset.pattern.permute.xlu0 0
  %1224 = vperm.xlu0 %1223, %v1170
  %v1225 = vpop.permute.xlu0 %1224
  %1228 = vset.pattern.permute.xlu0 0
  %1229 = vperm.xlu0 %1228, %v1171
  %v1230 = vpop.permute.xlu0 %1229
  %1233 = vset.pattern.permute.xlu0 0
  %1234 = vperm.xlu0 %1233, %v1172
  %v1235 = vpop.permute.xlu0 %1234
  %1238 = vset.pattern.permute.xlu0 0
  %1239 = vperm.xlu0 %1238, %v1173
  %v1240 = vpop.permute.xlu0 %1239
  %1243 = vset.pattern.permute.xlu0 0
  %1244 = vperm.xlu0 %1243, %v1174
  %v1245 = vpop.permute.xlu0 %1244
  %1248 = vset.pattern.permute.xlu0 0
  %1249 = vperm.xlu0 %1248, %v1175
  %v1250 = vpop.permute.xlu0 %1249
  %1253 = vset.pattern.permute.xlu0 0
  %1254 = vperm.xlu0 %1253, %v1176
  %v1255 = vpop.permute.xlu0 %1254
  %1258 = vset.pattern.permute.xlu0 0
  %1259 = vperm.xlu0 %1258, %v1177
  %v1260 = vpop.permute.xlu0 %1259
  %1263 = vset.pattern.permute.xlu0 0
  %1264 = vperm.xlu0 %1263, %v1178
  %v1265 = vpop.permute.xlu0 %1264
  %1268 = vset.pattern.permute.xlu0 0
  %1269 = vperm.xlu0 %1268, %v1179
  %v1270 = vpop.permute.xlu0 %1269
  %1273 = vset.pattern.permute.xlu0 0
  %1274 = vperm.xlu0 %1273, %v1180
  %v1275 = vpop.permute.xlu0 %1274
  %1278 = vset.pattern.permute.xlu0 0
  %1279 = vperm.xlu0 %1278, %v1181
  %v1280 = vpop.permute.xlu0 %1279
  %1283 = vset.pattern.permute.xlu0 0
  %1284 = vperm.xlu0 %1283, %v1182
  %v1285 = vpop.permute.xlu0 %1284
  %1288 = vset.pattern.permute.xlu0 0
  %1289 = vperm.xlu0 %1288, %v1183
  %v1290 = vpop.permute.xlu0 %1289
  %1293 = vset.pattern.permute.xlu0 0
  %1294 = vperm.xlu0 %1293, %v1184
  %v1295 = vpop.permute.xlu0 %1294
  %1298 = vset.pattern.permute.xlu0 0
  %1299 = vperm.xlu0 %1298, %v1185
  %v1300 = vpop.permute.xlu0 %1299
  %1303 = vset.pattern.permute.xlu0 0
  %1304 = vperm.xlu0 %1303, %v1186
  %v1305 = vpop.permute.xlu0 %1304
  %1308 = vset.pattern.permute.xlu0 0
  %1309 = vperm.xlu0 %1308, %v1187
  %v1310 = vpop.permute.xlu0 %1309
  %1313 = vset.pattern.permute.xlu0 0
  %1314 = vperm.xlu0 %1313, %v1188
  %v1315 = vpop.permute.xlu0 %1314
  %1318 = vset.pattern.permute.xlu0 0
  %1319 = vperm.xlu0 %1318, %v1189
  %v1320 = vpop.permute.xlu0 %1319
  %1323 = vset.pattern.permute.xlu0 0
  %1324 = vperm.xlu0 %1323, %v1190
  %v1325 = vpop.permute.xlu0 %1324
  %1328 = vset.pattern.permute.xlu0 0
  %1329 = vperm.xlu0 %1328, %v1191
  %v1330 = vpop.permute.xlu0 %1329
  %1333 = vset.pattern.permute.xlu0 0
  %1334 = vperm.xlu0 %1333, %v1192
  %v1335 = vpop.permute.xlu0 %1334
  %1338 = vset.pattern.permute.xlu0 0
  %1339 = vperm.xlu0 %1338, %v1193
  %v1340 = vpop.permute.xlu0 %1339
  %1343 = vset.pattern.permute.xlu0 0
  %1344 = vperm.xlu0 %1343, %v1194
  %v1345 = vpop.permute.xlu0 %1344
  %1348 = vset.pattern.permute.xlu0 0
  %1349 = vperm.xlu0 %1348, %v1195
  %v1350 = vpop.permute.xlu0 %1349
  %1353 = vset.pattern.permute.xlu0 0
  %1354 = vperm.xlu0 %1353, %v1196
  %v1355 = vpop.permute.xlu0 %1354
  %1357 = vmatprep.subr.mxu0 0.0
  %1358 = vmatpush1.msra.mxu0 %v1069
  %1359 = vmatprep.subr.mxu0 0.0
  %1360 = vmatpush1.msra.mxu0 %v1070
  %1361 = vmatprep.subr.mxu0 0.0
  %1362 = vmatpush1.msra.mxu0 %v1071
  %1363 = vmatprep.subr.mxu0 0.0
  %1364 = vmatpush1.msra.mxu0 %v1072
  %1365 = vmatprep.subr.mxu0 0.0
  %1366 = vmatpush1.msra.mxu0 %v1073
  %1367 = vmatprep.subr.mxu0 0.0
  %1368 = vmatpush1.msra.mxu0 %v1074
  %1369 = vmatprep.subr.mxu0 0.0
  %1370 = vmatpush1.msra.mxu0 %v1075
  %1371 = vmatprep.subr.mxu0 0.0
  %1372 = vmatpush1.msra.mxu0 %v1076
  %1373 = vmatprep.subr.mxu0 0.0
  %1374 = vmatpush1.msra.mxu0 %v1077
  %1375 = vmatprep.subr.mxu0 0.0
  %1376 = vmatpush1.msra.mxu0 %v1078
  %1377 = vmatprep.subr.mxu0 0.0
  %1378 = vmatpush1.msra.mxu0 %v1079
  %1379 = vmatprep.subr.mxu0 0.0
  %1380 = vmatpush1.msra.mxu0 %v1080
  %1381 = vmatprep.subr.mxu0 0.0
  %1382 = vmatpush1.msra.mxu0 %v1081
  %1383 = vmatprep.subr.mxu0 0.0
  %1384 = vmatpush1.msra.mxu0 %v1082
  %1385 = vmatprep.subr.mxu0 0.0
  %1386 = vmatpush1.msra.mxu0 %v1083
  %1387 = vmatprep.subr.mxu0 0.0
  %1388 = vmatpush1.msra.mxu0 %v1084
  %1389 = vmatprep.subr.mxu0 0.0
  %1390 = vmatpush1.msra.mxu0 %v1085
  %1391 = vmatprep.subr.mxu0 0.0
  %1392 = vmatpush1.msra.mxu0 %v1086
  %1393 = vmatprep.subr.mxu0 0.0
  %1394 = vmatpush1.msra.mxu0 %v1087
  %1395 = vmatprep.subr.mxu0 0.0
  %1396 = vmatpush1.msra.mxu0 %v1088
  %1397 = vmatprep.subr.mxu0 0.0
  %1398 = vmatpush1.msra.mxu0 %v1089
  %1399 = vmatprep.subr.mxu0 0.0
  %1400 = vmatpush1.msra.mxu0 %v1090
  %1401 = vmatprep.subr.mxu0 0.0
  %1402 = vmatpush1.msra.mxu0 %v1091
  %1403 = vmatprep.subr.mxu0 0.0
  %1404 = vmatpush1.msra.mxu0 %v1092
  %1405 = vmatprep.subr.mxu0 0.0
  %1406 = vmatpush1.msra.mxu0 %v1093
  %1407 = vmatprep.subr.mxu0 0.0
  %1408 = vmatpush1.msra.mxu0 %v1094
  %1409 = vmatprep.subr.mxu0 0.0
  %1410 = vmatpush1.msra.mxu0 %v1095
  %1411 = vmatprep.subr.mxu0 0.0
  %1412 = vmatpush1.msra.mxu0 %v1096
  %1413 = vmatprep.subr.mxu0 0.0
  %1414 = vmatpush1.msra.mxu0 %v1097
  %1415 = vmatprep.subr.mxu0 0.0
  %1416 = vmatpush1.msra.mxu0 %v1098
  %1417 = vmatprep.subr.mxu0 0.0
  %1418 = vmatpush1.msra.mxu0 %v1099
  %1419 = vmatprep.subr.mxu0 0.0
  %1420 = vmatpush1.msra.mxu0 %v1100
  %1421 = vmatprep.mubr.f32.mxu0 %v1102
  %1422 = vmatmul.mubr.f32.gmra.mrb[0].mxu0 %v1101
  %v1423 = vpop.f32.mrb[0].mxu0
  %v1424 = vadd.f32 %v1200, %v1423
  %v1425 = vpop.f32.mrb[0].mxu0
  %1426 = vmatprep.mubr.f32.mxu0 %v1104
  %1427 = vmatmul.mubr.f32.gmra.mrb[0].mxu0 %v1103
  %v1428 = vpop.f32.mrb[0].mxu0
  %v1429 = vadd.f32 %v1205, %v1428
  %v1430 = vpop.f32.mrb[0].mxu0
  %1431 = vmatprep.mubr.f32.mxu0 %v1106
  %1432 = vmatmul.mubr.f32.gmra.mrb[0].mxu0 %v1105
  %v1433 = vpop.f32.mrb[0].mxu0
  %v1434 = vadd.f32 %v1210, %v1433
  %v1435 = vpop.f32.mrb[0].mxu0
  %1436 = vmatprep.mubr.f32.mxu0 %v1108
  %1437 = vmatmul.mubr.f32.gmra.mrb[0].mxu0 %v1107
  %v1438 = vpop.f32.mrb[0].mxu0
  %v1439 = vadd.f32 %v1215, %v1438
  %v1440 = vpop.f32.mrb[0].mxu0
  %1441 = vmatprep.mubr.f32.mxu0 %v1110
  %1442 = vmatmul.mubr.f32.gmra.mrb[0].mxu0 %v1109
  %v1443 = vpop.f32.mrb[0].mxu0
  %v1444 = vadd.f32 %v1220, %v1443
  %v1445 = vpop.f32.mrb[0].mxu0
  %1446 = vmatprep.mubr.f32.mxu0 %v1112
  %1447 = vmatmul.mubr.f32.gmra.mrb[0].mxu0 %v1111
  %v1448 = vpop.f32.mrb[0].mxu0
  %v1449 = vadd.f32 %v1225, %v1448
  %v1450 = vpop.f32.mrb[0].mxu0
  %1451 = vmatprep.mubr.f32.mxu0 %v1114
  %1452 = vmatmul.mubr.f32.gmra.mrb[0].mxu0 %v1113
  %v1453 = vpop.f32.mrb[0].mxu0
  %v1454 = vadd.f32 %v1230, %v1453
  %v1455 = vpop.f32.mrb[0].mxu0
  %1456 = vmatprep.mubr.f32.mxu0 %v1116
  %1457 = vmatmul.mubr.f32.gmra.mrb[0].mxu0 %v1115
  %v1458 = vpop.f32.mrb[0].mxu0
  %v1459 = vadd.f32 %v1235, %v1458
  %v1460 = vpop.f32.mrb[0].mxu0
  %1461 = vmatprep.mubr.f32.mxu0 %v1118
  %1462 = vmatmul.mubr.f32.gmra.mrb[0].mxu0 %v1117
  %v1463 = vpop.f32.mrb[0].mxu0
  %v1464 = vadd.f32 %v1240, %v1463
  %v1465 = vpop.f32.mrb[0].mxu0
  %1466 = vmatprep.mubr.f32.mxu0 %v1120
  %1467 = vmatmul.mubr.f32.gmra.mrb[0].mxu0 %v1119
  %v1468 = vpop.f32.mrb[0].mxu0
  %v1469 = vadd.f32 %v1245, %v1468
  %v1470 = vpop.f32.mrb[0].mxu0
  %1471 = vmatprep.mubr.f32.mxu0 %v1122
  %1472 = vmatmul.mubr.f32.gmra.mrb[0].mxu0 %v1121
  %v1473 = vpop.f32.mrb[0].mxu0
  %v1474 = vadd.f32 %v1250, %v1473
  %v1475 = vpop.f32.mrb[0].mxu0
  %1476 = vmatprep.mubr.f32.mxu0 %v1124
  %1477 = vmatmul.mubr.f32.gmra.mrb[0].mxu0 %v1123
  %v1478 = vpop.f32.mrb[0].mxu0
  %v1479 = vadd.f32 %v1255, %v1478
  %v1480 = vpop.f32.mrb[0].mxu0
  %1481 = vmatprep.mubr.f32.mxu0 %v1126
  %1482 = vmatmul.mubr.f32.gmra.mrb[0].mxu0 %v1125
  %v1483 = vpop.f32.mrb[0].mxu0
  %v1484 = vadd.f32 %v1260, %v1483
  %v1485 = vpop.f32.mrb[0].mxu0
  %1486 = vmatprep.mubr.f32.mxu0 %v1128
  %1487 = vmatmul.mubr.f32.gmra.mrb[0].mxu0 %v1127
  %v1488 = vpop.f32.mrb[0].mxu0
  %v1489 = vadd.f32 %v1265, %v1488
  %v1490 = vpop.f32.mrb[0].mxu0
  %1491 = vmatprep.mubr.f32.mxu0 %v1130
  %1492 = vmatmul.mubr.f32.gmra.mrb[0].mxu0 %v1129
  %v1493 = vpop.f32.mrb[0].mxu0
  %v1494 = vadd.f32 %v1270, %v1493
  %v1495 = vpop.f32.mrb[0].mxu0
  %1496 = vmatprep.mubr.f32.mxu0 %v1132
  %1497 = vmatmul.mubr.f32.gmra.mrb[0].mxu0 %v1131
  %v1498 = vpop.f32.mrb[0].mxu0
  %v1499 = vadd.f32 %v1275, %v1498
  %v1500 = vpop.f32.mrb[0].mxu0
  %1501 = vmatprep.mubr.f32.mxu0 %v1134
  %1502 = vmatmul.mubr.f32.gmra.mrb[0].mxu0 %v1133
  %v1503 = vpop.f32.mrb[0].mxu0
  %v1504 = vadd.f32 %v1280, %v1503
  %v1505 = vpop.f32.mrb[0].mxu0
  %1506 = vmatprep.mubr.f32.mxu0 %v1136
  %1507 = vmatmul.mubr.f32.gmra.mrb[0].mxu0 %v1135
  %v1508 = vpop.f32.mrb[0].mxu0
  %v1509 = vadd.f32 %v1285, %v1508
  %v1510 = vpop.f32.mrb[0].mxu0
  %1511 = vmatprep.mubr.f32.mxu0 %v1138
  %1512 = vmatmul.mubr.f32.gmra.mrb[0].mxu0 %v1137
  %v1513 = vpop.f32.mrb[0].mxu0
  %v1514 = vadd.f32 %v1290, %v1513
  %v1515 = vpop.f32.mrb[0].mxu0
  %1516 = vmatprep.mubr.f32.mxu0 %v1140
  %1517 = vmatmul.mubr.f32.gmra.mrb[0].mxu0 %v1139
  %v1518 = vpop.f32.mrb[0].mxu0
  %v1519 = vadd.f32 %v1295, %v1518
  %v1520 = vpop.f32.mrb[0].mxu0
  %1521 = vmatprep.mubr.f32.mxu0 %v1142
  %1522 = vmatmul.mubr.f32.gmra.mrb[0].mxu0 %v1141
  %v1523 = vpop.f32.mrb[0].mxu0
  %v1524 = vadd.f32 %v1300, %v1523
  %v1525 = vpop.f32.mrb[0].mxu0
  %1526 = vmatprep.mubr.f32.mxu0 %v1144
  %1527 = vmatmul.mubr.f32.gmra.mrb[0].mxu0 %v1143
  %v1528 = vpop.f32.mrb[0].mxu0
  %v1529 = vadd.f32 %v1305, %v1528
  %v1530 = vpop.f32.mrb[0].mxu0
  %1531 = vmatprep.mubr.f32.mxu0 %v1146
  %1532 = vmatmul.mubr.f32.gmra.mrb[0].mxu0 %v1145
  %v1533 = vpop.f32.mrb[0].mxu0
  %v1534 = vadd.f32 %v1310, %v1533
  %v1535 = vpop.f32.mrb[0].mxu0
  %1536 = vmatprep.mubr.f32.mxu0 %v1148
  %1537 = vmatmul.mubr.f32.gmra.mrb[0].mxu0 %v1147
  %v1538 = vpop.f32.mrb[0].mxu0
  %v1539 = vadd.f32 %v1315, %v1538
  %v1540 = vpop.f32.mrb[0].mxu0
  %1541 = vmatprep.mubr.f32.mxu0 %v1150
  %1542 = vmatmul.mubr.f32.gmra.mrb[0].mxu0 %v1149
  %v1543 = vpop.f32.mrb[0].mxu0
  %v1544 = vadd.f32 %v1320, %v1543
  %v1545 = vpop.f32.mrb[0].mxu0
  %1546 = vmatprep.mubr.f32.mxu0 %v1152
  %1547 = vmatmul.mubr.f32.gmra.mrb[0].mxu0 %v1151
  %v1548 = vpop.f32.mrb[0].mxu0
  %v1549 = vadd.f32 %v1325, %v1548
  %v1550 = vpop.f32.mrb[0].mxu0
  %1551 = vmatprep.mubr.f32.mxu0 %v1154
  %1552 = vmatmul.mubr.f32.gmra.mrb[0].mxu0 %v1153
  %v1553 = vpop.f32.mrb[0].mxu0
  %v1554 = vadd.f32 %v1330, %v1553
  %v1555 = vpop.f32.mrb[0].mxu0
  %1556 = vmatprep.mubr.f32.mxu0 %v1156
  %1557 = vmatmul.mubr.f32.gmra.mrb[0].mxu0 %v1155
  %v1558 = vpop.f32.mrb[0].mxu0
  %v1559 = vadd.f32 %v1335, %v1558
  %v1560 = vpop.f32.mrb[0].mxu0
  %1561 = vmatprep.mubr.f32.mxu0 %v1158
  %1562 = vmatmul.mubr.f32.gmra.mrb[0].mxu0 %v1157
  %v1563 = vpop.f32.mrb[0].mxu0
  %v1564 = vadd.f32 %v1340, %v1563
  %v1565 = vpop.f32.mrb[0].mxu0
  %1566 = vmatprep.mubr.f32.mxu0 %v1160
  %1567 = vmatmul.mubr.f32.gmra.mrb[0].mxu0 %v1159
  %v1568 = vpop.f32.mrb[0].mxu0
  %v1569 = vadd.f32 %v1345, %v1568
  %v1570 = vpop.f32.mrb[0].mxu0
  %1571 = vmatprep.mubr.f32.mxu0 %v1162
  %1572 = vmatmul.mubr.f32.gmra.mrb[0].mxu0 %v1161
  %v1573 = vpop.f32.mrb[0].mxu0
  %v1574 = vadd.f32 %v1350, %v1573
  %v1575 = vpop.f32.mrb[0].mxu0
  %1576 = vmatprep.mubr.f32.mxu0 %v1164
  %1577 = vmatmul.mubr.f32.gmra.mrb[0].mxu0 %v1163
  %v1578 = vpop.f32.mrb[0].mxu0
  %v1579 = vadd.f32 %v1355, %v1578
  %v1580 = vpop.f32.mrb[0].mxu0
  %1581 = vdwg.mxu0
  %v1582 = vmax.f32 %v1424, 0.0
  %v1583 = vmax.f32 %v1429, 0.0
  %v1584 = vmax.f32 %v1434, 0.0
  %v1585 = vmax.f32 %v1439, 0.0
  %v1586 = vmax.f32 %v1444, 0.0
  %v1587 = vmax.f32 %v1449, 0.0
  %v1588 = vmax.f32 %v1454, 0.0
  %v1589 = vmax.f32 %v1459, 0.0
  %v1590 = vmax.f32 %v1464, 0.0
  %v1591 = vmax.f32 %v1469, 0.0
  %v1592 = vmax.f32 %v1474, 0.0
  %v1593 = vmax.f32 %v1479, 0.0
  %v1594 = vmax.f32 %v1484, 0.0
  %v1595 = vmax.f32 %v1489, 0.0
  %v1596 = vmax.f32 %v1494, 0.0
  %v1597 = vmax.f32 %v1499, 0.0
  %v1598 = vmax.f32 %v1504, 0.0
  %v1599 = vmax.f32 %v1509, 0.0
  %v1600 = vmax.f32 %v1514, 0.0
  %v1601 = vmax.f32 %v1519, 0.0
  %v1602 = vmax.f32 %v1524, 0.0
  %v1603 = vmax.f32 %v1529, 0.0
  %v1604 = vmax.f32 %v1534, 0.0
  %v1605 = vmax.f32 %v1539, 0.0
  %v1606 = vmax.f32 %v1544, 0.0
  %v1607 = vmax.f32 %v1549, 0.0
  %v1608 = vmax.f32 %v1554, 0.0
  %v1609 = vmax.f32 %v1559, 0.0
  %v1610 = vmax.f32 %v1564, 0.0
  %v1611 = vmax.f32 %v1569, 0.0
  %v1612 = vmax.f32 %v1574, 0.0
  %v1613 = vmax.f32 %v1579, 0.0
  %v1614 = vld [vmem:[%s5] sm:$0xff]
  %v1615 = vld [vmem:[%s5 + $0x8] sm:$0xff]
  %v1616 = vld [vmem:[%s5 + $0x10] sm:$0xff]
  %v1617 = vld [vmem:[%s5 + $0x18] sm:$0xff]
  %v1618 = vld [vmem:[%s5 + $0x20] sm:$0xff]
  %v1619 = vld [vmem:[%s5 + $0x28] sm:$0xff]
  %v1620 = vld [vmem:[%s5 + $0x30] sm:$0xff]
  %v1621 = vld [vmem:[%s5 + $0x38] sm:$0xff]
  %v1622 = vld [vmem:[%s5 + $0x40] sm:$0xff]
  %v1623 = vld [vmem:[%s5 + $0x48] sm:$0xff]
  %v1624 = vld [vmem:[%s5 + $0x50] sm:$0xff]
  %v1625 = vld [vmem:[%s5 + $0x58] sm:$0xff]
  %v1626 = vld [vmem:[%s5 + $0x60] sm:$0xff]
  %v1627 = vld [vmem:[%s5 + $0x68] sm:$0xff]
  %v1628 = vld [vmem:[%s5 + $0x70] sm:$0xff]
  %v1629 = vld [vmem:[%s5 + $0x78] sm:$0xff]
  %v1630 = vld [vmem:[%s5 + $0x80] sm:$0xff]
  %v1631 = vld [vmem:[%s5 + $0x88] sm:$0xff]
  %v1632 = vld [vmem:[%s5 + $0x90] sm:$0xff]
  %v1633 = vld [vmem:[%s5 + $0x98] sm:$0xff]
  %v1634 = vld [vmem:[%s5 + $0xa0] sm:$0xff]
  %v1635 = vld [vmem:[%s5 + $0xa8] sm:$0xff]
  %v1636 = vld [vmem:[%s5 + $0xb0] sm:$0xff]
  %v1637 = vld [vmem:[%s5 + $0xb8] sm:$0xff]
  %v1638 = vld [vmem:[%s5 + $0xc0] sm:$0xff]
  %v1639 = vld [vmem:[%s5 + $0xc8] sm:$0xff]
  %v1640 = vld [vmem:[%s5 + $0xd0] sm:$0xff]
  %v1641 = vld [vmem:[%s5 + $0xd8] sm:$0xff]
  %v1642 = vld [vmem:[%s5 + $0xe0] sm:$0xff]
  %v1643 = vld [vmem:[%s5 + $0xe8] sm:$0xff]
  %v1644 = vld [vmem:[%s5 + $0xf0] sm:$0xff]
  %v1645 = vld [vmem:[%s5 + $0xf8] sm:$0xff]
  %1647 = vset.pattern.permute.xlu0 0
  %1648 = vperm.xlu0 %1647, %v1614
  %v1649 = vpop.permute.xlu0 %1648
  %1652 = vset.pattern.permute.xlu0 0
  %1653 = vperm.xlu0 %1652, %v1615
  %v1654 = vpop.permute.xlu0 %1653
  %1657 = vset.pattern.permute.xlu0 0
  %1658 = vperm.xlu0 %1657, %v1616
  %v1659 = vpop.permute.xlu0 %1658
  %1662 = vset.pattern.permute.xlu0 0
  %1663 = vperm.xlu0 %1662, %v1617
  %v1664 = vpop.permute.xlu0 %1663
  %1667 = vset.pattern.permute.xlu0 0
  %1668 = vperm.xlu0 %1667, %v1618
  %v1669 = vpop.permute.xlu0 %1668
  %1672 = vset.pattern.permute.xlu0 0
  %1673 = vperm.xlu0 %1672, %v1619
  %v1674 = vpop.permute.xlu0 %1673
  %1677 = vset.pattern.permute.xlu0 0
  %1678 = vperm.xlu0 %1677, %v1620
  %v1679 = vpop.permute.xlu0 %1678
  %1682 = vset.pattern.permute.xlu0 0
  %1683 = vperm.xlu0 %1682, %v1621
  %v1684 = vpop.permute.xlu0 %1683
  %1687 = vset.pattern.permute.xlu0 0
  %1688 = vperm.xlu0 %1687, %v1622
  %v1689 = vpop.permute.xlu0 %1688
  %1692 = vset.pattern.permute.xlu0 0
  %1693 = vperm.xlu0 %1692, %v1623
  %v1694 = vpop.permute.xlu0 %1693
  %1697 = vset.pattern.permute.xlu0 0
  %1698 = vperm.xlu0 %1697, %v1624
  %v1699 = vpop.permute.xlu0 %1698
  %1702 = vset.pattern.permute.xlu0 0
  %1703 = vperm.xlu0 %1702, %v1625
  %v1704 = vpop.permute.xlu0 %1703
  %1707 = vset.pattern.permute.xlu0 0
  %1708 = vperm.xlu0 %1707, %v1626
  %v1709 = vpop.permute.xlu0 %1708
  %1712 = vset.pattern.permute.xlu0 0
  %1713 = vperm.xlu0 %1712, %v1627
  %v1714 = vpop.permute.xlu0 %1713
  %1717 = vset.pattern.permute.xlu0 0
  %1718 = vperm.xlu0 %1717, %v1628
  %v1719 = vpop.permute.xlu0 %1718
  %1722 = vset.pattern.permute.xlu0 0
  %1723 = vperm.xlu0 %1722, %v1629
  %v1724 = vpop.permute.xlu0 %1723
  %1727 = vset.pattern.permute.xlu0 0
  %1728 = vperm.xlu0 %1727, %v1630
  %v1729 = vpop.permute.xlu0 %1728
  %1732 = vset.pattern.permute.xlu0 0
  %1733 = vperm.xlu0 %1732, %v1631
  %v1734 = vpop.permute.xlu0 %1733
  %1737 = vset.pattern.permute.xlu0 0
  %1738 = vperm.xlu0 %1737, %v1632
  %v1739 = vpop.permute.xlu0 %1738
  %1742 = vset.pattern.permute.xlu0 0
  %1743 = vperm.xlu0 %1742, %v1633
  %v1744 = vpop.permute.xlu0 %1743
  %1747 = vset.pattern.permute.xlu0 0
  %1748 = vperm.xlu0 %1747, %v1634
  %v1749 = vpop.permute.xlu0 %1748
  %1752 = vset.pattern.permute.xlu0 0
  %1753 = vperm.xlu0 %1752, %v1635
  %v1754 = vpop.permute.xlu0 %1753
  %1757 = vset.pattern.permute.xlu0 0
  %1758 = vperm.xlu0 %1757, %v1636
  %v1759 = vpop.permute.xlu0 %1758
  %1762 = vset.pattern.permute.xlu0 0
  %1763 = vperm.xlu0 %1762, %v1637
  %v1764 = vpop.permute.xlu0 %1763
  %1767 = vset.pattern.permute.xlu0 0
  %1768 = vperm.xlu0 %1767, %v1638
  %v1769 = vpop.permute.xlu0 %1768
  %1772 = vset.pattern.permute.xlu0 0
  %1773 = vperm.xlu0 %1772, %v1639
  %v1774 = vpop.permute.xlu0 %1773
  %1777 = vset.pattern.permute.xlu0 0
  %1778 = vperm.xlu0 %1777, %v1640
  %v1779 = vpop.permute.xlu0 %1778
  %1782 = vset.pattern.permute.xlu0 0
  %1783 = vperm.xlu0 %1782, %v1641
  %v1784 = vpop.permute.xlu0 %1783
  %1787 = vset.pattern.permute.xlu0 0
  %1788 = vperm.xlu0 %1787, %v1642
  %v1789 = vpop.permute.xlu0 %1788
  %1792 = vset.pattern.permute.xlu0 0
  %1793 = vperm.xlu0 %1792, %v1643
  %v1794 = vpop.permute.xlu0 %1793
  %1797 = vset.pattern.permute.xlu0 0
  %1798 = vperm.xlu0 %1797, %v1644
  %v1799 = vpop.permute.xlu0 %1798
  %1802 = vset.pattern.permute.xlu0 0
  %1803 = vperm.xlu0 %1802, %v1645
  %v1804 = vpop.permute.xlu0 %1803
  %v1806 = vmul.f32 %v1582, %v1649
  %v1807 = vmul.f32 %v1583, %v1654
  %v1808 = vmul.f32 %v1584, %v1659
  %v1809 = vmul.f32 %v1585, %v1664
  %v1810 = vmul.f32 %v1586, %v1669
  %v1811 = vmul.f32 %v1587, %v1674
  %v1812 = vmul.f32 %v1588, %v1679
  %v1813 = vmul.f32 %v1589, %v1684
  %v1814 = vmul.f32 %v1590, %v1689
  %v1815 = vmul.f32 %v1591, %v1694
  %v1816 = vmul.f32 %v1592, %v1699
  %v1817 = vmul.f32 %v1593, %v1704
  %v1818 = vmul.f32 %v1594, %v1709
  %v1819 = vmul.f32 %v1595, %v1714
  %v1820 = vmul.f32 %v1596, %v1719
  %v1821 = vmul.f32 %v1597, %v1724
  %v1822 = vmul.f32 %v1598, %v1729
  %v1823 = vmul.f32 %v1599, %v1734
  %v1824 = vmul.f32 %v1600, %v1739
  %v1825 = vmul.f32 %v1601, %v1744
  %v1826 = vmul.f32 %v1602, %v1749
  %v1827 = vmul.f32 %v1603, %v1754
  %v1828 = vmul.f32 %v1604, %v1759
  %v1829 = vmul.f32 %v1605, %v1764
  %v1830 = vmul.f32 %v1606, %v1769
  %v1831 = vmul.f32 %v1607, %v1774
  %v1832 = vmul.f32 %v1608, %v1779
  %v1833 = vmul.f32 %v1609, %v1784
  %v1834 = vmul.f32 %v1610, %v1789
  %v1835 = vmul.f32 %v1611, %v1794
  %v1836 = vmul.f32 %v1612, %v1799
  %v1837 = vmul.f32 %v1613, %v1804
  %v1838 = vadd.f32 %v1806, %v1807
  %v1839 = vadd.f32 %v1838, %v1808
  %v1840 = vadd.f32 %v1839, %v1809
  %v1841 = vadd.f32 %v1840, %v1810
  %v1842 = vadd.f32 %v1841, %v1811
  %v1843 = vadd.f32 %v1842, %v1812
  %v1844 = vadd.f32 %v1843, %v1813
  %v1845 = vadd.f32 %v1844, %v1814
  %v1846 = vadd.f32 %v1845, %v1815
  %v1847 = vadd.f32 %v1846, %v1816
  %v1848 = vadd.f32 %v1847, %v1817
  %v1849 = vadd.f32 %v1848, %v1818
  %v1850 = vadd.f32 %v1849, %v1819
  %v1851 = vadd.f32 %v1850, %v1820
  %v1852 = vadd.f32 %v1851, %v1821
  %v1853 = vadd.f32 %v1852, %v1822
  %v1854 = vadd.f32 %v1853, %v1823
  %v1855 = vadd.f32 %v1854, %v1824
  %v1856 = vadd.f32 %v1855, %v1825
  %v1857 = vadd.f32 %v1856, %v1826
  %v1858 = vadd.f32 %v1857, %v1827
  %v1859 = vadd.f32 %v1858, %v1828
  %v1860 = vadd.f32 %v1859, %v1829
  %v1861 = vadd.f32 %v1860, %v1830
  %v1862 = vadd.f32 %v1861, %v1831
  %v1863 = vadd.f32 %v1862, %v1832
  %v1864 = vadd.f32 %v1863, %v1833
  %v1865 = vadd.f32 %v1864, %v1834
  %v1866 = vadd.f32 %v1865, %v1835
  %v1867 = vadd.f32 %v1866, %v1836
  %v1868 = vadd.f32 %v1867, %v1837
  %v1869 = vrot.slane %v1868, 4
  %v1870 = vadd.f32 %v1868, %v1869
  %v1871 = vrot.slane %v1870, 2
  %v1872 = vadd.f32 %v1870, %v1871
  %v1873 = vrot.slane %v1872, 1
  %v1874 = vadd.f32 %v1872, %v1873
  %v1875 = vld [vmem:[#allocation2] sm:$0x1]
  %1877 = vset.pattern.permute.xlu0 0
  %1878 = vperm.xlu0 %1877, %v1875
  %v1879 = vpop.permute.xlu0 %1878
  %v1881 = vlaneseq
  %v1882 = vshrl.u32 %v1881, 7
  %v1883 = vsub.s32 0, %v1882
  %v1884 = vrot.slane %v1879, %v1883
  %v1885 = vadd.f32 %v1874, %v1884
  %1886 = vst [vmem:[%s7] sm:$0x1] %v1885
  // Predicated region
  $region30: #{critic_forward.1} parent=0 // pred_check
    _
  $region31: #{critic_forward.1} parent=0 // pred_check_branch
    %1888 = sbr.rel (0) target = $region33
  $region32: #{critic_forward.1} parent=0 // pred_region
    _
  $region33: #{critic_forward.1} parent=0 // pred_fallthru
    _
  // Predicated region
  $region34: #{critic_forward.1} parent=0 // pred_check
    _
  $region35: #{critic_forward.1} parent=0 // pred_check_branch
    %1890 = sbr.rel (0) target = $region37
  $region36: #{critic_forward.1} parent=0 // pred_region
    _
  $region37: #{critic_forward.1} parent=0 // pred_fallthru
    _

</llo_original>
